<compile_context>
chip_gen: v7x
topology: tpu7x:2x2x1
jax: 0.10.0
libtpu: 0.0.40
codegen_flags: <defaults>
</compile_context>

<pallas_src>
import functools

import jax
import jax.numpy as jnp
from jax.experimental import pallas as pl
from jax.experimental.pallas import tpu as pltpu


TD = 256          # D-axis (attention-column / h1-reduction) tile; multiple of 128
C_PAD = 128       # classifier output padded to a full lane width
TB_CAP = 256      # batch-tile cap


def _round_up(x, m):
    return (x + m - 1) // m * m


# ----------------------------------------------------------------------------
# Pallas kernel: attention gate + fused h1 reduction + fusion MLP epilogue
# ----------------------------------------------------------------------------
def _fusion_head_kernel(
    cf_ref,            # [TB, Dp]  bf16  combined features (full feature dim)
    wa_ref,            # [Dp, TD]  bf16  attention weight column tile (pre-tiled, contiguous)
    ba_ref,            # [1, TD]   f32   attention bias tile
    w1_ref,            # [TD, H1]  bf16  fusion-1 weight row tile (BN folded)
    b1_ref,            # [1, H1]   f32   fusion-1 bias (BN folded)
    w2_ref,            # [H1, H2]  bf16  fusion-2 weight (BN folded)
    b2_ref,            # [1, H2]   f32
    w3_ref,            # [H2, Cp]  bf16  classifier weight (lane-padded)
    b3_ref,            # [1, Cp]   f32
    out_ref,           # [TB, Cp]  f32
    h1_acc,            # VMEM [TB, H1] f32 scratch accumulator
    *, td,
):
    k = pl.program_id(1)

    @pl.when(k == 0)
    def _init():
        h1_acc[...] = jnp.zeros_like(h1_acc)

    # Full combined-feature row block, already bf16 -> feeds the MXU directly
    # (no per-step VPU cast of the full block).
    cf_b = cf_ref[...]                                                # [TB, Dp] bf16

    # attention slice = sigmoid(cf @ wa[:, tile] + ba[tile])
    att = jax.nn.sigmoid(
        jnp.dot(cf_b, wa_ref[...], preferred_element_type=jnp.float32)
        + ba_ref[...]
    )                                                                 # [TB, TD] f32

    # weighted features for the same column tile (only the small slice is upcast)
    col0 = pl.multiple_of(k * td, td)
    cf_tile = cf_ref[:, pl.ds(col0, td)].astype(jnp.float32)          # [TB, TD] f32
    wf_tile = (cf_tile * att).astype(jnp.bfloat16)

    # fused fusion-layer-1 reduction (BN scale already folded into w1)
    h1_acc[...] += jnp.dot(wf_tile, w1_ref[...],
                           preferred_element_type=jnp.float32)

    @pl.when(k == pl.num_programs(1) - 1)
    def _finalize():
        # Linear1 -> BN -> ReLU (Dropout = identity in eval)
        h1 = jnp.maximum(h1_acc[...] + b1_ref[...], 0.0)
        # Linear2 -> BN -> ReLU
        h2 = jnp.dot(h1.astype(jnp.bfloat16), w2_ref[...],
                     preferred_element_type=jnp.float32) + b2_ref[...]
        h2 = jnp.maximum(h2, 0.0)
        # classifier (lane-padded columns are zero)
        out = jnp.dot(h2.astype(jnp.bfloat16), w3_ref[...],
                      preferred_element_type=jnp.float32) + b3_ref[...]
        out_ref[...] = out.astype(out_ref.dtype)


# ----------------------------------------------------------------------------
# Wrapper: padding, BlockSpecs, grid, generation-aware VMEM budget, cost estimate
# ----------------------------------------------------------------------------
def fusion_head_pallas(combined, kp):
    B, D = combined.shape
    nd, Dp, td = kp["wa"].shape                 # attention weight pre-tiled [nd, Dp, td]
    H1 = kp["w1"].shape[1]
    H2 = kp["w2"].shape[1]
    Cp = kp["w3"].shape[1]
    C = kp["c"]

    # Batch tile: multiple of 16 (bf16 sublane pack), capped at 256.
    tb = min(_round_up(B, 16), TB_CAP)
    Bp = _round_up(B, tb)
    nb = Bp // tb

    # bf16 combined features into the kernel (single wrapper-side cast);
    # the f32 `combined` array is still returned by the model wrapper.
    cf = jnp.pad(combined.astype(jnp.bfloat16), ((0, Bp - B), (0, Dp - D)))

    grid_spec = pltpu.PrefetchScalarGridSpec(
        num_scalar_prefetch=0,
        grid=(nb, nd),
        in_specs=[
            pl.BlockSpec((tb, Dp), lambda i, k: (i, 0)),          # cf (resident over k)
            pl.BlockSpec((None, Dp, td), lambda i, k: (k, 0, 0)), # wa contiguous tile
            pl.BlockSpec((1, td), lambda i, k: (0, k)),           # ba tile
            pl.BlockSpec((td, H1), lambda i, k: (k, 0)),          # w1 row tile (contiguous)
            pl.BlockSpec((1, H1), lambda i, k: (0, 0)),           # b1 (folded)
            pl.BlockSpec((H1, H2), lambda i, k: (0, 0)),          # w2 (folded)
            pl.BlockSpec((1, H2), lambda i, k: (0, 0)),           # b2 (folded)
            pl.BlockSpec((H2, Cp), lambda i, k: (0, 0)),          # w3 (lane-padded)
            pl.BlockSpec((1, Cp), lambda i, k: (0, 0)),           # b3 (lane-padded)
        ],
        out_specs=pl.BlockSpec((tb, Cp), lambda i, k: (i, 0)),
        scratch_shapes=[pltpu.VMEM((tb, H1), jnp.float32)],
    )

    # VMEM budget from the tile math; the 2x factor IS the double-buffering.
    per_buf = (
        tb * Dp * 2            # cf (bf16)
        + Dp * td * 2          # wa tile
        + td * 4               # ba tile
        + td * H1 * 2          # w1 tile
        + H1 * 4               # b1
        + H1 * H2 * 2          # w2
        + H2 * 4               # b2
        + H2 * Cp * 2          # w3
        + Cp * 4               # b3
        + tb * Cp * 4          # out
    )
    vmem_est = 2 * per_buf + tb * H1 * 4

    # Generation-aware ceiling (v7x has only 64 MiB VMEM per TensorCore).
    try:
        vmem_cap = int(pltpu.get_tpu_info().vmem_capacity_bytes)
    except Exception:
        vmem_cap = 64 * 1024 * 1024
    vmem_ceiling = min((vmem_cap * 7) // 8, 100 * 1024 * 1024)
    vmem_limit = int(min(max(32 * 1024 * 1024, vmem_est + (4 << 20)), vmem_ceiling))

    flops = int(2 * Bp * Dp * Dp + 2 * Bp * Dp * H1
                + 2 * Bp * H1 * H2 + 2 * Bp * H2 * Cp)
    transcendentals = int(Bp * Dp)                  # sigmoid
    bytes_accessed = int(
        Bp * Dp * 2                                     # cf (bf16)
        + nb * (Dp * Dp * 2 + Dp * H1 * 2)              # wa/w1 re-streamed per batch tile
        + nb * (H1 * H2 * 2 + H2 * Cp * 2)              # w2/w3
        + nb * (Dp + H1 + H2 + Cp) * 4                  # biases
        + Bp * Cp * 4                                   # output
    )

    out_padded = pl.pallas_call(
        functools.partial(_fusion_head_kernel, td=td),
        out_shape=jax.ShapeDtypeStruct((Bp, Cp), jnp.float32),
        grid_spec=grid_spec,
        compiler_params=pltpu.CompilerParams(
            dimension_semantics=("parallel", "arbitrary"),
            vmem_limit_bytes=vmem_limit,
        ),
        cost_estimate=pl.CostEstimate(
            flops=flops,
            transcendentals=transcendentals,
            bytes_accessed=bytes_accessed,
        ),
    )(cf, kp["wa"], kp["ba"], kp["w1"], kp["b1"],
      kp["w2"], kp["b2"], kp["w3"], kp["b3"])

    return out_padded[:B, :C]


# ----------------------------------------------------------------------------
# FusionModel.forward (from the point where backbone features exist)
# ----------------------------------------------------------------------------
def fusion_model_forward(resnet_features, efficientnet_features, kernel_params):
    # combined_features is part of the module's return value (kept f32);
    # the kernel consumes a bf16 copy streamed through VMEM.
    combined_features = jnp.concatenate(
        [resnet_features, efficientnet_features], axis=1
    ).astype(jnp.float32)
    output = fusion_head_pallas(combined_features, kernel_params)
    return output, combined_features


# ----------------------------------------------------------------------------
# Parameter prep: fold BatchNorm into Linear, cast weights to bf16, pre-tile wa
# ----------------------------------------------------------------------------
def prepare_kernel_params(raw, *, td=TD, c_pad=C_PAD):
    D = raw["wa"].shape[0]
    C = raw["w3"].shape[1]
    Dp = _round_up(D, td)
    Cp = _round_up(max(C, c_pad), 128)
    nd = Dp // td

    # Fold eval-mode BatchNorm1d (scale s, shift t) into the preceding Linear.
    w1f = raw["w1"] * raw["s1"]
    b1f = raw["b1"] * raw["s1"] + raw["t1"]
    w2f = raw["w2"] * raw["s2"]
    b2f = raw["b2"] * raw["s2"] + raw["t2"]

    # Pad, then pre-tile the attention weight so each (Dp, td) column tile is a
    # single contiguous slab in HBM:  [Dp, Dp] -> [Dp, nd, td] -> [nd, Dp, td].
    wa_p = jnp.pad(raw["wa"], ((0, Dp - D), (0, Dp - D)))
    wa_tiled = wa_p.reshape(Dp, nd, td).transpose(1, 0, 2)

    ba_p = jnp.pad(raw["ba"], ((0, 0), (0, Dp - D)))
    w1_p = jnp.pad(w1f, ((0, Dp - D), (0, 0)))
    w3_p = jnp.pad(raw["w3"], ((0, 0), (0, Cp - C)))
    b3_p = jnp.pad(raw["b3"], ((0, 0), (0, Cp - C)))

    bf = lambda x: x.astype(jnp.bfloat16)
    f32 = lambda x: x.astype(jnp.float32)
    return dict(
        wa=bf(wa_tiled), ba=f32(ba_p),
        w1=bf(w1_p), b1=f32(b1f),
        w2=bf(w2f), b2=f32(b2f),
        w3=bf(w3_p), b3=f32(b3_p),
        d=D, c=C,
    )


# ----------------------------------------------------------------------------
# Deterministic raw parameter init (PyTorch-default-style uniform; eval-mode BN)
# ----------------------------------------------------------------------------
def init_params(key, d_res, d_eff, h1, h2, num_classes):
    d = d_res + d_eff
    ks = jax.random.split(key, 8)

    def lin(k, fan_in, fan_out):
        ka, kb = jax.random.split(k)
        bound = 1.0 / jnp.sqrt(fan_in)
        w = jax.random.uniform(ka, (fan_in, fan_out), jnp.float32, -bound, bound)
        b = jax.random.uniform(kb, (1, fan_out), jnp.float32, -bound, bound)
        return w, b

    wa, ba = lin(ks[0], d, d)
    w1, b1 = lin(ks[1], d, h1)
    w2, b2 = lin(ks[2], h1, h2)
    w3, b3 = lin(ks[3], h2, num_classes)

    eps = 1e-5

    def bn_fold(k, n):
        kg, kb2, km, kv = jax.random.split(k, 4)
        gamma = 1.0 + 0.1 * jax.random.normal(kg, (1, n), jnp.float32)
        beta = 0.1 * jax.random.normal(kb2, (1, n), jnp.float32)
        mean = 0.1 * jax.random.normal(km, (1, n), jnp.float32)
        var = jnp.abs(1.0 + 0.1 * jax.random.normal(kv, (1, n), jnp.float32))
        scale = gamma / jnp.sqrt(var + eps)
        shift = beta - mean * scale
        return scale, shift

    s1, t1 = bn_fold(ks[4], h1)
    s2, t2 = bn_fold(ks[5], h2)

    return dict(wa=wa, ba=ba, w1=w1, b1=b1, s1=s1, t1=t1,
                w2=w2, b2=b2, s2=s2, t2=t2, w3=w3, b3=b3)


# ----------------------------------------------------------------------------
# Pure-JAX reference (emulates the kernel's bf16-input/weight, f32-accum numerics)
# ----------------------------------------------------------------------------
def reference_forward(resnet_features, efficientnet_features, raw):
    hp = jax.lax.Precision.HIGHEST
    rb = lambda x: x.astype(jnp.bfloat16).astype(jnp.float32)   # bf16 rounding

    cf = jnp.concatenate([resnet_features, efficientnet_features], axis=1)
    cf = cf.astype(jnp.float32)
    cfb = rb(cf)                                                 # kernel input is bf16

    att = jax.nn.sigmoid(jnp.dot(cfb, rb(raw["wa"]), precision=hp) + raw["ba"])
    wf = rb(cfb * att)

    w1f = raw["w1"] * raw["s1"]
    b1f = raw["b1"] * raw["s1"] + raw["t1"]
    h1 = jnp.maximum(jnp.dot(wf, rb(w1f), precision=hp) + b1f, 0.0)

    w2f = raw["w2"] * raw["s2"]
    b2f = raw["b2"] * raw["s2"] + raw["t2"]
    h2 = jnp.maximum(jnp.dot(rb(h1), rb(w2f), precision=hp) + b2f, 0.0)

    out = jnp.dot(rb(h2), rb(raw["w3"]), precision=hp) + raw["b3"]
    return out, cf


if __name__ == "__main__":
    # Small, structure-preserving sizes (real model: d_res=2048, d_eff=1280,
    # fusion hidden = 512 / 256); the kernel tiling is size-independent.
    B = 2
    D_RES, D_EFF = 256, 128
    H1, H2 = 512, 256
    NUM_CLASSES = 2

    key = jax.random.PRNGKey(0)
    k_params, k_res, k_eff = jax.random.split(key, 3)

    raw_params = init_params(k_params, D_RES, D_EFF, H1, H2, NUM_CLASSES)
    kernel_params = prepare_kernel_params(raw_params)

    # Stand-in backbone features (backbones are TODO(synk) above).
    resnet_features = jax.random.normal(k_res, (B, D_RES), jnp.float32)
    efficientnet_features = jax.random.normal(k_eff, (B, D_EFF), jnp.float32)

    output, combined = fusion_model_forward(
        resnet_features, efficientnet_features, kernel_params
    )
    output = jax.block_until_ready(output)
    combined = jax.block_until_ready(combined)

    ref_out, ref_comb = reference_forward(
        resnet_features, efficientnet_features, raw_params
    )

    assert output.shape == (B, NUM_CLASSES)
    assert combined.shape == (B, D_RES + D_EFF)
    assert jnp.allclose(combined, ref_comb)
    assert jnp.allclose(output, ref_out, atol=1e-2, rtol=1e-2), float(
        jnp.max(jnp.abs(output - ref_out))
    )
    print("KERNEL_OK")
</pallas_src>

<mosaic_0001>
module attributes {stable_mosaic.version = 11 : i64} {
  func.func @_fusion_head_kernel(%arg0: i32, %arg1: i32, %arg2: memref<16x512xbf16, #tpu.memory_space<vmem>>, %arg3: memref<1x512x256xbf16, #tpu.memory_space<vmem>>, %arg4: memref<1x256xf32, #tpu.memory_space<vmem>>, %arg5: memref<256x512xbf16, #tpu.memory_space<vmem>>, %arg6: memref<1x512xf32, #tpu.memory_space<vmem>>, %arg7: memref<512x256xbf16, #tpu.memory_space<vmem>>, %arg8: memref<1x256xf32, #tpu.memory_space<vmem>>, %arg9: memref<256x128xbf16, #tpu.memory_space<vmem>>, %arg10: memref<1x128xf32, #tpu.memory_space<vmem>>, %arg11: memref<16x128xf32, #tpu.memory_space<vmem>>, %arg12: memref<16x512xf32, #tpu.memory_space<vmem>>) attributes {dimension_semantics = [#tpu.dimension_semantics<parallel>, #tpu.dimension_semantics<arbitrary>], iteration_bounds = array<i64: 1, 2>, scalar_prefetch = 0 : i64, scratch_operands = 1 : i64, tpu.core_type = #tpu.core_type<tc>, window_params = [{transform_indices = @transform_0, window_bounds = array<i64: 16, 512>}, {transform_indices = @transform_1, window_bounds = array<i64: 1, 512, 256>}, {transform_indices = @transform_2, window_bounds = array<i64: 1, 256>}, {transform_indices = @transform_3, window_bounds = array<i64: 256, 512>}, {pipeline_mode = #tpu.pipeline_mode<synchronous>, transform_indices = @transform_4, window_bounds = array<i64: 1, 512>}, {pipeline_mode = #tpu.pipeline_mode<synchronous>, transform_indices = @transform_5, window_bounds = array<i64: 512, 256>}, {pipeline_mode = #tpu.pipeline_mode<synchronous>, transform_indices = @transform_6, window_bounds = array<i64: 1, 256>}, {pipeline_mode = #tpu.pipeline_mode<synchronous>, transform_indices = @transform_7, window_bounds = array<i64: 256, 128>}, {pipeline_mode = #tpu.pipeline_mode<synchronous>, transform_indices = @transform_8, window_bounds = array<i64: 1, 128>}, {transform_indices = @transform_9, window_bounds = array<i64: 16, 128>}]} {
    %c0_i32 = arith.constant 0 : i32
    %0 = arith.cmpi eq, %arg1, %c0_i32 : i32
    %1 = arith.extui %0 : i1 to i32
    %c0_i32_0 = arith.constant 0 : i32
    %2 = arith.cmpi ne, %1, %c0_i32_0 : i32
    scf.if %2 {
      %cst_17 = arith.constant 0.000000e+00 : f32
      %30 = vector.broadcast %cst_17 : f32 to vector<16x512xf32>
      %c0_18 = arith.constant 0 : index
      %c0_19 = arith.constant 0 : index
      %31 = vector.load %arg12[%c0_18, %c0_19] : memref<16x512xf32, #tpu.memory_space<vmem>>, vector<16x512xf32>
      tpu.vector_store %arg12[%c0_18, %c0_19], %30 {strides = array<i32>} : memref<16x512xf32, #tpu.memory_space<vmem>>, vector<16x512xf32>,
    } else {
    }
    %c0 = arith.constant 0 : index
    %c0_1 = arith.constant 0 : index
    %3 = vector.load %arg2[%c0, %c0_1] : memref<16x512xbf16, #tpu.memory_space<vmem>>, vector<16x512xbf16>
    %c0_2 = arith.constant 0 : index
    %c0_3 = arith.constant 0 : index
    %c0_4 = arith.constant 0 : index
    %4 = vector.load %arg3[%c0_2, %c0_3, %c0_4] : memref<1x512x256xbf16, #tpu.memory_space<vmem>>, vector<1x512x256xbf16>
    %5 = vector.shape_cast %4 : vector<1x512x256xbf16> to vector<512x256xbf16>
    %cst = arith.constant dense<0.000000e+00> : vector<16x256xf32>
    %6 = tpu.matmul %3, %5, %cst {dimension_numbers = #tpu.dot_dimension_numbers<[1], [0], [0], [1], [0, 0, 1, 1], [], []>} : vector<16x512xbf16>, vector<512x256xbf16>, vector<16x256xf32> -> vector<16x256xf32>
    %c0_5 = arith.constant 0 : index
    %c0_6 = arith.constant 0 : index
    %7 = vector.load %arg4[%c0_5, %c0_6] : memref<1x256xf32, #tpu.memory_space<vmem>>, vector<1x256xf32>
    %8 = vector.broadcast %7 : vector<1x256xf32> to vector<16x256xf32>
    %9 = arith.addf %6, %8 : vector<16x256xf32>
    %10 = arith.negf %9 : vector<16x256xf32>
    %11 = math.exp %10 : vector<16x256xf32>
    %cst_7 = arith.constant 1.000000e+00 : f32
    %12 = vector.broadcast %cst_7 : f32 to vector<16x256xf32>
    %13 = arith.addf %12, %11 : vector<16x256xf32>
    %14 = arith.divf %12, %13 : vector<16x256xf32>
    %c256_i32 = arith.constant 256 : i32
    %15 = arith.muli %arg1, %c256_i32 : i32
    %16 = tpu.assume_multiple %15, 256 : i32
    %c0_8 = arith.constant 0 : index
    %17 = arith.index_cast %16 : i32 to index
    %18 = vector.load %arg2[%c0_8, %17] : memref<16x512xbf16, #tpu.memory_space<vmem>>, vector<16x256xbf16>
    %19 = arith.extf %18 : vector<16x256xbf16> to vector<16x256xf32>
    %20 = arith.mulf %19, %14 : vector<16x256xf32>
    %21 = arith.truncf %20 : vector<16x256xf32> to vector<16x256xbf16>
    %c0_9 = arith.constant 0 : index
    %c0_10 = arith.constant 0 : index
    %22 = vector.load %arg12[%c0_9, %c0_10] : memref<16x512xf32, #tpu.memory_space<vmem>>, vector<16x512xf32>
    %c0_11 = arith.constant 0 : index
    %c0_12 = arith.constant 0 : index
    %23 = vector.load %arg5[%c0_11, %c0_12] : memref<256x512xbf16, #tpu.memory_space<vmem>>, vector<256x512xbf16>
    %cst_13 = arith.constant dense<0.000000e+00> : vector<16x512xf32>
    %24 = tpu.matmul %21, %23, %cst_13 {dimension_numbers = #tpu.dot_dimension_numbers<[1], [0], [0], [1], [0, 0, 1, 1], [], []>} : vector<16x256xbf16>, vector<256x512xbf16>, vector<16x512xf32> -> vector<16x512xf32>
    %25 = arith.addf %22, %24 : vector<16x512xf32>
    %c0_14 = arith.constant 0 : index
    %c0_15 = arith.constant 0 : index
    %26 = vector.load %arg12[%c0_14, %c0_15] : memref<16x512xf32, #tpu.memory_space<vmem>>, vector<16x512xf32>
    tpu.vector_store %arg12[%c0_14, %c0_15], %25 {strides = array<i32>} : memref<16x512xf32, #tpu.memory_space<vmem>>, vector<16x512xf32>,
    %c1_i32 = arith.constant 1 : i32
    %27 = arith.cmpi eq, %arg1, %c1_i32 : i32
    %28 = arith.extui %27 : i1 to i32
    %c0_i32_16 = arith.constant 0 : i32
    %29 = arith.cmpi ne, %28, %c0_i32_16 : i32
    scf.if %29 {
      %c0_17 = arith.constant 0 : index
      %c0_18 = arith.constant 0 : index
      %30 = vector.load %arg12[%c0_17, %c0_18] : memref<16x512xf32, #tpu.memory_space<vmem>>, vector<16x512xf32>
      %c0_19 = arith.constant 0 : index
      %c0_20 = arith.constant 0 : index
      %31 = vector.load %arg6[%c0_19, %c0_20] : memref<1x512xf32, #tpu.memory_space<vmem>>, vector<1x512xf32>
      %32 = vector.broadcast %31 : vector<1x512xf32> to vector<16x512xf32>
      %33 = arith.addf %30, %32 : vector<16x512xf32>
      %cst_21 = arith.constant 0.000000e+00 : f32
      %34 = vector.broadcast %cst_21 : f32 to vector<16x512xf32>
      %35 = arith.maximumf %33, %34 : vector<16x512xf32>
      %36 = arith.truncf %35 : vector<16x512xf32> to vector<16x512xbf16>
      %c0_22 = arith.constant 0 : index
      %c0_23 = arith.constant 0 : index
      %37 = vector.load %arg7[%c0_22, %c0_23] : memref<512x256xbf16, #tpu.memory_space<vmem>>, vector<512x256xbf16>
      %cst_24 = arith.constant dense<0.000000e+00> : vector<16x256xf32>
      %38 = tpu.matmul %36, %37, %cst_24 {dimension_numbers = #tpu.dot_dimension_numbers<[1], [0], [0], [1], [0, 0, 1, 1], [], []>} : vector<16x512xbf16>, vector<512x256xbf16>, vector<16x256xf32> -> vector<16x256xf32>
      %c0_25 = arith.constant 0 : index
      %c0_26 = arith.constant 0 : index
      %39 = vector.load %arg8[%c0_25, %c0_26] : memref<1x256xf32, #tpu.memory_space<vmem>>, vector<1x256xf32>
      %40 = vector.broadcast %39 : vector<1x256xf32> to vector<16x256xf32>
      %41 = arith.addf %38, %40 : vector<16x256xf32>
      %cst_27 = arith.constant 0.000000e+00 : f32
      %42 = vector.broadcast %cst_27 : f32 to vector<16x256xf32>
      %43 = arith.maximumf %41, %42 : vector<16x256xf32>
      %44 = arith.truncf %43 : vector<16x256xf32> to vector<16x256xbf16>
      %c0_28 = arith.constant 0 : index
      %c0_29 = arith.constant 0 : index
      %45 = vector.load %arg9[%c0_28, %c0_29] : memref<256x128xbf16, #tpu.memory_space<vmem>>, vector<256x128xbf16>
      %cst_30 = arith.constant dense<0.000000e+00> : vector<16x128xf32>
      %46 = tpu.matmul %44, %45, %cst_30 {dimension_numbers = #tpu.dot_dimension_numbers<[1], [0], [0], [1], [0, 0, 1, 1], [], []>} : vector<16x256xbf16>, vector<256x128xbf16>, vector<16x128xf32> -> vector<16x128xf32>
      %c0_31 = arith.constant 0 : index
      %c0_32 = arith.constant 0 : index
      %47 = vector.load %arg10[%c0_31, %c0_32] : memref<1x128xf32, #tpu.memory_space<vmem>>, vector<1x128xf32>
      %48 = vector.broadcast %47 : vector<1x128xf32> to vector<16x128xf32>
      %49 = arith.addf %46, %48 : vector<16x128xf32>
      %c0_33 = arith.constant 0 : index
      %c0_34 = arith.constant 0 : index
      %50 = vector.load %arg11[%c0_33, %c0_34] : memref<16x128xf32, #tpu.memory_space<vmem>>, vector<16x128xf32>
      tpu.vector_store %arg11[%c0_33, %c0_34], %49 {strides = array<i32>} : memref<16x128xf32, #tpu.memory_space<vmem>>, vector<16x128xf32>,
    } else {
    }
    return
  }
  func.func @transform_0(%arg0: i32, %arg1: i32) -> (i32, i32) {
    %c0_i32 = arith.constant 0 : i32
    %c0_i32_0 = arith.constant 0 : i32
    return %arg0, %c0_i32 : i32, i32
  }
  func.func @transform_1(%arg0: i32, %arg1: i32) -> (i32, i32, i32) {
    %c0_i32 = arith.constant 0 : i32
    %c0_i32_0 = arith.constant 0 : i32
    %c0_i32_1 = arith.constant 0 : i32
    return %arg1, %c0_i32, %c0_i32_0 : i32, i32, i32
  }
  func.func @transform_2(%arg0: i32, %arg1: i32) -> (i32, i32) {
    %c0_i32 = arith.constant 0 : i32
    %c0_i32_0 = arith.constant 0 : i32
    return %c0_i32, %arg1 : i32, i32
  }
  func.func @transform_3(%arg0: i32, %arg1: i32) -> (i32, i32) {
    %c0_i32 = arith.constant 0 : i32
    %c0_i32_0 = arith.constant 0 : i32
    return %arg1, %c0_i32 : i32, i32
  }
  func.func @transform_4(%arg0: i32, %arg1: i32) -> (i32, i32) {
    %c0_i32 = arith.constant 0 : i32
    %c0_i32_0 = arith.constant 0 : i32
    %c0_i32_1 = arith.constant 0 : i32
    return %c0_i32, %c0_i32_0 : i32, i32
  }
  func.func @transform_5(%arg0: i32, %arg1: i32) -> (i32, i32) {
    %c0_i32 = arith.constant 0 : i32
    %c0_i32_0 = arith.constant 0 : i32
    %c0_i32_1 = arith.constant 0 : i32
    return %c0_i32, %c0_i32_0 : i32, i32
  }
  func.func @transform_6(%arg0: i32, %arg1: i32) -> (i32, i32) {
    %c0_i32 = arith.constant 0 : i32
    %c0_i32_0 = arith.constant 0 : i32
    %c0_i32_1 = arith.constant 0 : i32
    return %c0_i32, %c0_i32_0 : i32, i32
  }
  func.func @transform_7(%arg0: i32, %arg1: i32) -> (i32, i32) {
    %c0_i32 = arith.constant 0 : i32
    %c0_i32_0 = arith.constant 0 : i32
    %c0_i32_1 = arith.constant 0 : i32
    return %c0_i32, %c0_i32_0 : i32, i32
  }
  func.func @transform_8(%arg0: i32, %arg1: i32) -> (i32, i32) {
    %c0_i32 = arith.constant 0 : i32
    %c0_i32_0 = arith.constant 0 : i32
    %c0_i32_1 = arith.constant 0 : i32
    return %c0_i32, %c0_i32_0 : i32, i32
  }
  func.func @transform_9(%arg0: i32, %arg1: i32) -> (i32, i32) {
    %c0_i32 = arith.constant 0 : i32
    %c0_i32_0 = arith.constant 0 : i32
    return %arg0, %c0_i32 : i32, i32
  }
}

</mosaic_0001>

<llo_original>
// kernel: tpu_custom_call.1
$region0: #{tpu_custom_call.1}
  #allocation0 [shape = 'u32[]', space=smem, size = 0x4, offset = 0x4, fixed_abs, tag = 'smem constant byte address 0x4 - core index']
  #allocation1 [shape = 'u32[144,128]{1,0:T(1,128)}', space=vmem, size = 0x12000, scoped, tag = 'internal scratch']
  #allocation2 [shape = 'f32[16,512]{1,0:T(8,128)}', space=vmem, size = 0x8000, scoped, tag = 'scratch operand']
  %s0 = inlined_call_operand.hbm [shape: bf16[16,512], index: 0, kind: input, shape index: {}]
  %s1 = inlined_call_operand.hbm [shape: bf16[2,512,256], index: 1, kind: input, shape index: {}]
  %s2 = inlined_call_operand.vmem [shape: f32[1,512], index: 2, kind: input, shape index: {}]
  %s3 = inlined_call_operand.hbm [shape: bf16[512,512], index: 3, kind: input, shape index: {}]
  %s4 = inlined_call_operand.vmem [shape: f32[1,512], index: 4, kind: input, shape index: {}]
  %s5 = inlined_call_operand.hbm [shape: bf16[512,256], index: 5, kind: input, shape index: {}]
  %s6 = inlined_call_operand.vmem [shape: f32[1,256], index: 6, kind: input, shape index: {}]
  %s7 = inlined_call_operand.hbm [shape: bf16[256,128], index: 7, kind: input, shape index: {}]
  %s8 = inlined_call_operand.vmem [shape: f32[1,128], index: 8, kind: input, shape index: {}]
  %s9 = inlined_call_operand.hbm [shape: f32[16,128], index: 9, kind: output, shape index: {}]
  %s10 = sld [smem:[#allocation0]]
  $region97: #{tpu_custom_call.1} parent=0
    _
  %s12 = ssub.s32 1, %s10
  %s13 = scalar_select 0, %s12, %s10
  $region1: #{tpu_custom_call.1} parent=0
    #allocation3 [shape = 'u8[16384]{0}', space=vmem, size = 0x4000, scoped, tag = 'input window, operand 0, single buffered']
    #allocation4 [shape = 's32[2]{0}', space=sflag, size = 0x8, scoped, tag = 'scoped memory for tpu_custom_call.1']
    #allocation5 [shape = 's32[2]{0}', space=sflag, size = 0x8, scoped, tag = 'scoped memory for tpu_custom_call.1']
    #allocation6 [shape = 'u8[524288]{0}', space=vmem, size = 0x80000, scoped, tag = 'input window, operand 1']
    #allocation7 [shape = 's32[2]{0}', space=sflag, size = 0x8, scoped, tag = 'scoped memory for tpu_custom_call.1']
    #allocation8 [shape = 'u8[524288]{0}', space=vmem, size = 0x80000, scoped, tag = 'input window, operand 3']
    #allocation9 [shape = 'u8[262144]{0}', space=vmem, size = 0x40000, scoped, tag = 'input window, operand 5, single buffered']
    #allocation10 [shape = 's32[1]{0}', space=sflag, size = 0x4, scoped, tag = 'scoped memory for tpu_custom_call.1']
    #allocation11 [shape = 'u8[65536]{0}', space=vmem, size = 0x10000, scoped, tag = 'input window, operand 7, single buffered']
    #allocation12 [shape = 'u8[8192]{0}', space=vmem, size = 0x2000, scoped, tag = 'output window, operand 0, single buffered']
    %14 = vsyncpa [#allocation4], 0
    %15 = vsyncpa [#allocation7], 0
    %s16 = scalar_lea.sflag [#allocation7], 1
    %17 = vsyncpa %s16, 0
    %18 = vsyncpa [#allocation10], 0
    %19 = vsyncpa [#allocation5], 0
    loop: start=0, step=1, limit=4
    $region2: #{tpu_custom_call.1} parent=1 // loop_pre_header
      _
    $region3: #{tpu_custom_call.1} parent=1 // loop_header
      %s21 = sphi 0, %s25
      %p22 = scmp.ge.s32.totalorder %s21, 4
      %s28 = sphi 0, %s40
      %s29 = sphi 0, %s36
      %s30 = sphi 0, %s28
      %s31 = sphi 0, %s29
      %s32 = sphi 0, %s30
      %s33 = sphi 0, %s31
      %s43 = sphi 0, %s45
      %s46 = sphi 0, %s43
      %s47 = sphi 0, %s46
      %s63 = sphi 0, %s47
      %s69 = sphi 0, %s71
      %s72 = sphi 0, %s69
      %s73 = sphi 0, %s72
      %s89 = sphi 0, %s73
      %s95 = sphi 0, %s97
      %s98 = sphi 0, %s95
      %s99 = sphi 0, %s98
      %s115 = sphi 0, %s99
      %s121 = sphi 0, %s123
      %s124 = sphi 0, %s121
      %s125 = sphi 0, %s124
      %s141 = sphi 0, %s125
      %s145 = sphi 0, %s145
      %s147 = sphi 0, %s145
      %s148 = sphi 0, %s147
      %s162 = sphi 0, %s148
      %s166 = sphi 0, %s166
      %s168 = sphi 0, %s166
      %s169 = sphi 0, %s168
      %s183 = sphi 0, %s169
      %s187 = sphi 0, %s187
      %s189 = sphi 0, %s187
      %s190 = sphi 0, %s189
      %s204 = sphi 0, %s190
      %s208 = sphi 0, %s208
      %s210 = sphi 0, %s208
      %s211 = sphi 0, %s210
      %s225 = sphi 0, %s211
      %s229 = sphi 0, %s229
      %s231 = sphi 0, %s229
      %s232 = sphi 0, %s231
      %s246 = sphi 0, %s232
      %s252 = sphi 0, %s254
      %s255 = sphi 0, %s252
      %s256 = sphi 0, %s255
      %s272 = sphi 0, %s256
    $region4: #{tpu_custom_call.1} parent=1 // loop_header_branch
      %24 = sbr.rel (%p22) target = $region8
    $region5: #{tpu_custom_call.1} parent=1 // loop_body
      %s26 = ssub.s32 %s21, 1
      %s27 = ssub.s32 %s21, 2
      %s34 = sadd.s32 1, %s29
      %p35 = scmp.ge.s32.totalorder %s34, 2
      %s36 = scalar_select %p35, 0, %s34
      %s37 = sadd.s32 1, %s28
      %s38 = scalar_select %p35, %s37, %s28
      %p39 = scmp.ge.s32.totalorder %s38, 1
      %s40 = scalar_select %p39, 0, %s38
      %s41 = ssub.s32 %s28, %s40
      %p42 = scmp.eq.s32.totalorder %s41, 0
      %s44 = sadd.s32 %s43, 1
      %s45 = scalar_select %p42, %s43, %s44
      %p48 = pneg %p42
      %p49 = scmp.eq.s32.totalorder %s21, 1
      %p50 = por %p48, %p49
      %p51 = scmp.ne.s32.totalorder %s43, %s46
      %p52 = scmp.eq.s32.totalorder %s21, 0
      %p53 = por %p51, %p52
      %p54 = scmp.ne.s32.totalorder %s43, %s46
      %p55 = scmp.eq.s32.totalorder %s26, 1
      %p56 = por %p54, %p55
      %p57 = scmp.ne.s32.totalorder %s46, %s47
      %p58 = scmp.eq.s32.totalorder %s26, 0
      %p59 = por %p57, %p58
      %p60 = scmp.ne.s32.totalorder %s46, %s47
      %p61 = scmp.eq.s32.totalorder %s27, 1
      %p62 = por %p60, %p61
      %p64 = scmp.ne.s32.totalorder %s47, %s63
      %p65 = scmp.eq.s32.totalorder %s27, 0
      %p66 = por %p64, %p65
      %s67 = ssub.s32 %s29, %s36
      %p68 = scmp.eq.s32.totalorder %s67, 0
      %s70 = sadd.s32 %s69, 1
      %s71 = scalar_select %p68, %s69, %s70
      %p74 = pneg %p68
      %p75 = scmp.eq.s32.totalorder %s21, 1
      %p76 = por %p74, %p75
      %p77 = scmp.ne.s32.totalorder %s69, %s72
      %p78 = scmp.eq.s32.totalorder %s21, 0
      %p79 = por %p77, %p78
      %p80 = scmp.ne.s32.totalorder %s69, %s72
      %p81 = scmp.eq.s32.totalorder %s26, 1
      %p82 = por %p80, %p81
      %p83 = scmp.ne.s32.totalorder %s72, %s73
      %p84 = scmp.eq.s32.totalorder %s26, 0
      %p85 = por %p83, %p84
      %p86 = scmp.ne.s32.totalorder %s72, %s73
      %p87 = scmp.eq.s32.totalorder %s27, 1
      %p88 = por %p86, %p87
      %p90 = scmp.ne.s32.totalorder %s73, %s89
      %p91 = scmp.eq.s32.totalorder %s27, 0
      %p92 = por %p90, %p91
      %s93 = ssub.s32 %s29, %s36
      %p94 = scmp.eq.s32.totalorder %s93, 0
      %s96 = sadd.s32 %s95, 1
      %s97 = scalar_select %p94, %s95, %s96
      %p100 = pneg %p94
      %p101 = scmp.eq.s32.totalorder %s21, 1
      %p102 = por %p100, %p101
      %p103 = scmp.ne.s32.totalorder %s95, %s98
      %p104 = scmp.eq.s32.totalorder %s21, 0
      %p105 = por %p103, %p104
      %p106 = scmp.ne.s32.totalorder %s95, %s98
      %p107 = scmp.eq.s32.totalorder %s26, 1
      %p108 = por %p106, %p107
      %p109 = scmp.ne.s32.totalorder %s98, %s99
      %p110 = scmp.eq.s32.totalorder %s26, 0
      %p111 = por %p109, %p110
      %p112 = scmp.ne.s32.totalorder %s98, %s99
      %p113 = scmp.eq.s32.totalorder %s27, 1
      %p114 = por %p112, %p113
      %p116 = scmp.ne.s32.totalorder %s99, %s115
      %p117 = scmp.eq.s32.totalorder %s27, 0
      %p118 = por %p116, %p117
      %s119 = ssub.s32 %s29, %s36
      %p120 = scmp.eq.s32.totalorder %s119, 0
      %s122 = sadd.s32 %s121, 1
      %s123 = scalar_select %p120, %s121, %s122
      %p126 = pneg %p120
      %p127 = scmp.eq.s32.totalorder %s21, 1
      %p128 = por %p126, %p127
      %p129 = scmp.ne.s32.totalorder %s121, %s124
      %p130 = scmp.eq.s32.totalorder %s21, 0
      %p131 = por %p129, %p130
      %p132 = scmp.ne.s32.totalorder %s121, %s124
      %p133 = scmp.eq.s32.totalorder %s26, 1
      %p134 = por %p132, %p133
      %p135 = scmp.ne.s32.totalorder %s124, %s125
      %p136 = scmp.eq.s32.totalorder %s26, 0
      %p137 = por %p135, %p136
      %p138 = scmp.ne.s32.totalorder %s124, %s125
      %p139 = scmp.eq.s32.totalorder %s27, 1
      %p140 = por %p138, %p139
      %p142 = scmp.ne.s32.totalorder %s125, %s141
      %p143 = scmp.eq.s32.totalorder %s27, 0
      %p144 = por %p142, %p143
      %s146 = sadd.s32 %s145, 1
      %p149 = scmp.eq.s32.totalorder %s21, 1
      %p150 = scmp.ne.s32.totalorder %s145, %s147
      %p151 = scmp.eq.s32.totalorder %s21, 0
      %p152 = por %p150, %p151
      %p153 = scmp.ne.s32.totalorder %s145, %s147
      %p154 = scmp.eq.s32.totalorder %s26, 1
      %p155 = por %p153, %p154
      %p156 = scmp.ne.s32.totalorder %s147, %s148
      %p157 = scmp.eq.s32.totalorder %s26, 0
      %p158 = por %p156, %p157
      %p159 = scmp.ne.s32.totalorder %s147, %s148
      %p160 = scmp.eq.s32.totalorder %s27, 1
      %p161 = por %p159, %p160
      %p163 = scmp.ne.s32.totalorder %s148, %s162
      %p164 = scmp.eq.s32.totalorder %s27, 0
      %p165 = por %p163, %p164
      %s167 = sadd.s32 %s166, 1
      %p170 = scmp.eq.s32.totalorder %s21, 1
      %p171 = scmp.ne.s32.totalorder %s166, %s168
      %p172 = scmp.eq.s32.totalorder %s21, 0
      %p173 = por %p171, %p172
      %p174 = scmp.ne.s32.totalorder %s166, %s168
      %p175 = scmp.eq.s32.totalorder %s26, 1
      %p176 = por %p174, %p175
      %p177 = scmp.ne.s32.totalorder %s168, %s169
      %p178 = scmp.eq.s32.totalorder %s26, 0
      %p179 = por %p177, %p178
      %p180 = scmp.ne.s32.totalorder %s168, %s169
      %p181 = scmp.eq.s32.totalorder %s27, 1
      %p182 = por %p180, %p181
      %p184 = scmp.ne.s32.totalorder %s169, %s183
      %p185 = scmp.eq.s32.totalorder %s27, 0
      %p186 = por %p184, %p185
      %s188 = sadd.s32 %s187, 1
      %p191 = scmp.eq.s32.totalorder %s21, 1
      %p192 = scmp.ne.s32.totalorder %s187, %s189
      %p193 = scmp.eq.s32.totalorder %s21, 0
      %p194 = por %p192, %p193
      %p195 = scmp.ne.s32.totalorder %s187, %s189
      %p196 = scmp.eq.s32.totalorder %s26, 1
      %p197 = por %p195, %p196
      %p198 = scmp.ne.s32.totalorder %s189, %s190
      %p199 = scmp.eq.s32.totalorder %s26, 0
      %p200 = por %p198, %p199
      %p201 = scmp.ne.s32.totalorder %s189, %s190
      %p202 = scmp.eq.s32.totalorder %s27, 1
      %p203 = por %p201, %p202
      %p205 = scmp.ne.s32.totalorder %s190, %s204
      %p206 = scmp.eq.s32.totalorder %s27, 0
      %p207 = por %p205, %p206
      %s209 = sadd.s32 %s208, 1
      %p212 = scmp.eq.s32.totalorder %s21, 1
      %p213 = scmp.ne.s32.totalorder %s208, %s210
      %p214 = scmp.eq.s32.totalorder %s21, 0
      %p215 = por %p213, %p214
      %p216 = scmp.ne.s32.totalorder %s208, %s210
      %p217 = scmp.eq.s32.totalorder %s26, 1
      %p218 = por %p216, %p217
      %p219 = scmp.ne.s32.totalorder %s210, %s211
      %p220 = scmp.eq.s32.totalorder %s26, 0
      %p221 = por %p219, %p220
      %p222 = scmp.ne.s32.totalorder %s210, %s211
      %p223 = scmp.eq.s32.totalorder %s27, 1
      %p224 = por %p222, %p223
      %p226 = scmp.ne.s32.totalorder %s211, %s225
      %p227 = scmp.eq.s32.totalorder %s27, 0
      %p228 = por %p226, %p227
      %s230 = sadd.s32 %s229, 1
      %p233 = scmp.eq.s32.totalorder %s21, 1
      %p234 = scmp.ne.s32.totalorder %s229, %s231
      %p235 = scmp.eq.s32.totalorder %s21, 0
      %p236 = por %p234, %p235
      %p237 = scmp.ne.s32.totalorder %s229, %s231
      %p238 = scmp.eq.s32.totalorder %s26, 1
      %p239 = por %p237, %p238
      %p240 = scmp.ne.s32.totalorder %s231, %s232
      %p241 = scmp.eq.s32.totalorder %s26, 0
      %p242 = por %p240, %p241
      %p243 = scmp.ne.s32.totalorder %s231, %s232
      %p244 = scmp.eq.s32.totalorder %s27, 1
      %p245 = por %p243, %p244
      %p247 = scmp.ne.s32.totalorder %s232, %s246
      %p248 = scmp.eq.s32.totalorder %s27, 0
      %p249 = por %p247, %p248
      %s250 = ssub.s32 %s28, %s40
      %p251 = scmp.eq.s32.totalorder %s250, 0
      %s253 = sadd.s32 %s252, 1
      %s254 = scalar_select %p251, %s252, %s253
      %p257 = pneg %p251
      %p258 = scmp.eq.s32.totalorder %s21, 1
      %p259 = por %p257, %p258
      %p260 = scmp.ne.s32.totalorder %s252, %s255
      %p261 = scmp.eq.s32.totalorder %s21, 0
      %p262 = por %p260, %p261
      %p263 = scmp.ne.s32.totalorder %s252, %s255
      %p264 = scmp.eq.s32.totalorder %s26, 1
      %p265 = por %p263, %p264
      %p266 = scmp.ne.s32.totalorder %s255, %s256
      %p267 = scmp.eq.s32.totalorder %s26, 0
      %p268 = por %p266, %p267
      %p269 = scmp.ne.s32.totalorder %s255, %s256
      %p270 = scmp.eq.s32.totalorder %s27, 1
      %p271 = por %p269, %p270
      %p273 = scmp.ne.s32.totalorder %s256, %s272
      %p274 = scmp.eq.s32.totalorder %s27, 0
      %p275 = por %p273, %p274
      %p276 = scmp.le.s32.totalorder 1, %s21
      %p277 = scmp.lt.s32.totalorder %s21, 3
      %p278 = pnand %p276, %p277
      %p279 = pneg %p278
      // Predicated region
      $region9: #{tpu_custom_call.1} parent=5 // pred_check
        _
      $region10: #{tpu_custom_call.1} parent=5 // pred_check_branch
        %281 = sbr.rel (%p278) target = $region12
      $region11: #{tpu_custom_call.1} parent=5 // pred_region
        %s282 = ssub.s32 %s21, 1
        // Predicated region
        $region13: #{tpu_custom_call.1} parent=11 // pred_check
          %p283 = pneg %p59
        $region14: #{tpu_custom_call.1} parent=11 // pred_check_branch
          %285 = sbr.rel (%p283) target = $region16
        $region15: #{tpu_custom_call.1} parent=11 // pred_region
          %s286 = smul.u32 2, %s30
          %s288 = ssub.s32 512, 512
          %289 = vsyncadd [#allocation4], %s288
          %s290 = smul.addr %s286, 4
          %s291 = smul.addr %s290, 64
          %s292 = scalar_lea.hbm %s0, %s291
          %s293 = sshll.u32 [#allocation3], 4
          %s294 = int_to_ptr.vmem [resolvable:$true] %s293
          %299 = dma.hbm_to_vmem [thread:$0]  %s292, 512, %s294, [#allocation4], 256, 256, 16
        $region16: #{tpu_custom_call.1} parent=11 // pred_fallthru
          _
        // Predicated region
        $region17: #{tpu_custom_call.1} parent=11 // pred_check
          %p300 = pneg %p158
        $region18: #{tpu_custom_call.1} parent=11 // pred_check_branch
          %302 = sbr.rel (%p300) target = $region20
        $region19: #{tpu_custom_call.1} parent=11 // pred_region
          _
        $region20: #{tpu_custom_call.1} parent=11 // pred_fallthru
          _
        // Predicated region
        $region21: #{tpu_custom_call.1} parent=11 // pred_check
          %p303 = pneg %p179
        $region22: #{tpu_custom_call.1} parent=11 // pred_check_branch
          %305 = sbr.rel (%p303) target = $region24
        $region23: #{tpu_custom_call.1} parent=11 // pred_region
          %s307 = ssub.s32 8192, 8192
          %308 = vsyncadd [#allocation10], %s307
          %s309 = sshll.u32 [#allocation9], 4
          %s310 = int_to_ptr.vmem [resolvable:$true] %s309
          %315 = dma.hbm_to_vmem [thread:$0]  %s5, 8192, %s310, [#allocation10], 128, 128, 8
        $region24: #{tpu_custom_call.1} parent=11 // pred_fallthru
          _
        // Predicated region
        $region25: #{tpu_custom_call.1} parent=11 // pred_check
          %p316 = pneg %p200
        $region26: #{tpu_custom_call.1} parent=11 // pred_check_branch
          %318 = sbr.rel (%p316) target = $region28
        $region27: #{tpu_custom_call.1} parent=11 // pred_region
          _
        $region28: #{tpu_custom_call.1} parent=11 // pred_fallthru
          _
        // Predicated region
        $region29: #{tpu_custom_call.1} parent=11 // pred_check
          %p319 = pneg %p221
        $region30: #{tpu_custom_call.1} parent=11 // pred_check_branch
          %321 = sbr.rel (%p319) target = $region32
        $region31: #{tpu_custom_call.1} parent=11 // pred_region
          %s323 = ssub.s32 2048, 2048
          %324 = vsyncadd [#allocation10], %s323
          %s325 = sshll.u32 [#allocation11], 4
          %s326 = int_to_ptr.vmem [resolvable:$true] %s325
          %331 = dma.hbm_to_vmem [thread:$0]  %s7, 2048, %s326, [#allocation10], 64, 64, 4
        $region32: #{tpu_custom_call.1} parent=11 // pred_fallthru
          _
        // Predicated region
        $region33: #{tpu_custom_call.1} parent=11 // pred_check
          %p332 = pneg %p242
        $region34: #{tpu_custom_call.1} parent=11 // pred_check_branch
          %334 = sbr.rel (%p332) target = $region36
        $region35: #{tpu_custom_call.1} parent=11 // pred_region
          _
        $region36: #{tpu_custom_call.1} parent=11 // pred_fallthru
          _
      $region12: #{tpu_custom_call.1} parent=5 // pred_fallthru
        _
      %p335 = scmp.lt.s32.totalorder %s21, 2
      // Predicated region
      $region37: #{tpu_custom_call.1} parent=5 // pred_check
        %p336 = pneg %p335
      $region38: #{tpu_custom_call.1} parent=5 // pred_check_branch
        %338 = sbr.rel (%p336) target = $region40
      $region39: #{tpu_custom_call.1} parent=5 // pred_region
        // Predicated region
        $region41: #{tpu_custom_call.1} parent=39 // pred_check
          %p339 = pneg %p79
        $region42: #{tpu_custom_call.1} parent=39 // pred_check_branch
          %341 = sbr.rel (%p339) target = $region44
        $region43: #{tpu_custom_call.1} parent=39 // pred_region
          %s342 = sand.u32 %s21, 1
          %s343 = scalar_lea.sflag [#allocation7], %s342
          %s344 = sand.u32 %s69, 1
          %s345 = smul.addr %s344, 512
          %s346 = scalar_lea.vmem [#allocation6], %s345
          %s348 = ssub.s32 8192, 8192
          %349 = vsyncadd %s343, %s348
          %s350 = smul.addr %s29, 128
          %s351 = smul.addr %s350, 64
          %s352 = scalar_lea.hbm %s1, %s351
          %s353 = sshll.u32 %s346, 4
          %s354 = int_to_ptr.vmem [resolvable:$true] %s353
          %359 = dma.hbm_to_vmem [thread:$0]  %s352, 8192, %s354, %s343, 128, 128, 8
        $region44: #{tpu_custom_call.1} parent=39 // pred_fallthru
          _
        // Predicated region
        $region45: #{tpu_custom_call.1} parent=39 // pred_check
          %p360 = pneg %p105
        $region46: #{tpu_custom_call.1} parent=39 // pred_check_branch
          %362 = sbr.rel (%p360) target = $region48
        $region47: #{tpu_custom_call.1} parent=39 // pred_region
          %s363 = smul.u32 2, %s29
          %p364 = scmp.lt.s32.totalorder %s363, 3
          %s365 = scalar_select %p364, %s363, 3
          %s366 = scalar_lea.vmem %s2, %s365
          %s367 = smul.u32 2, %s29
        $region48: #{tpu_custom_call.1} parent=39 // pred_fallthru
          _
        // Predicated region
        $region49: #{tpu_custom_call.1} parent=39 // pred_check
          %p368 = pneg %p131
        $region50: #{tpu_custom_call.1} parent=39 // pred_check_branch
          %370 = sbr.rel (%p368) target = $region52
        $region51: #{tpu_custom_call.1} parent=39 // pred_region
          %s371 = sand.u32 %s21, 1
          %s372 = scalar_lea.sflag [#allocation7], %s371
          %s373 = sand.u32 %s121, 1
          %s374 = smul.addr %s373, 512
          %s375 = scalar_lea.vmem [#allocation8], %s374
          %s376 = smul.u32 32, %s29
          %s378 = ssub.s32 8192, 8192
          %379 = vsyncadd %s372, %s378
          %s380 = smul.addr %s376, 4
          %s381 = smul.addr %s380, 64
          %s382 = scalar_lea.hbm %s3, %s381
          %s383 = sshll.u32 %s375, 4
          %s384 = int_to_ptr.vmem [resolvable:$true] %s383
          %389 = dma.hbm_to_vmem [thread:$0]  %s382, 8192, %s384, %s372, 256, 256, 16
        $region52: #{tpu_custom_call.1} parent=39 // pred_fallthru
          _
      $region40: #{tpu_custom_call.1} parent=5 // pred_fallthru
        _
      %p390 = scmp.le.s32.totalorder 1, %s21
      %p391 = scmp.lt.s32.totalorder %s21, 3
      %p392 = pnand %p390, %p391
      %p393 = pneg %p392
      // Predicated region
      $region53: #{tpu_custom_call.1} parent=5 // pred_check
        _
      $region54: #{tpu_custom_call.1} parent=5 // pred_check_branch
        %395 = sbr.rel (%p392) target = $region56
      $region55: #{tpu_custom_call.1} parent=5 // pred_region
        %s396 = ssub.s32 %s21, 1
        // Predicated region
        $region57: #{tpu_custom_call.1} parent=55 // pred_check
          %p397 = pneg %p59
        $region58: #{tpu_custom_call.1} parent=55 // pred_check_branch
          %399 = sbr.rel (%p397) target = $region60
        $region59: #{tpu_custom_call.1} parent=55 // pred_region
          %400 = dma.done [#allocation4], 512
        $region60: #{tpu_custom_call.1} parent=55 // pred_fallthru
          _
        %s401 = sand.u32 %s26, 1
        %s402 = scalar_lea.sflag [#allocation7], %s401
        %s403 = sand.u32 %s72, 1
        %s404 = smul.addr %s403, 512
        %s405 = scalar_lea.vmem [#allocation6], %s404
        // Predicated region
        $region61: #{tpu_custom_call.1} parent=55 // pred_check
          %p406 = pneg %p85
        $region62: #{tpu_custom_call.1} parent=55 // pred_check_branch
          %408 = sbr.rel (%p406) target = $region64
        $region63: #{tpu_custom_call.1} parent=55 // pred_region
          %409 = dma.done %s402, 8192
        $region64: #{tpu_custom_call.1} parent=55 // pred_fallthru
          _
        %s410 = sand.u32 %s26, 1
        %s411 = scalar_lea.sflag [#allocation7], %s410
        %s412 = sand.u32 %s124, 1
        %s413 = smul.addr %s412, 512
        %s414 = scalar_lea.vmem [#allocation8], %s413
        // Predicated region
        $region65: #{tpu_custom_call.1} parent=55 // pred_check
          %p415 = pneg %p137
        $region66: #{tpu_custom_call.1} parent=55 // pred_check_branch
          %417 = sbr.rel (%p415) target = $region68
        $region67: #{tpu_custom_call.1} parent=55 // pred_region
          %418 = dma.done %s411, 8192
        $region68: #{tpu_custom_call.1} parent=55 // pred_fallthru
          _
        // Predicated region
        $region69: #{tpu_custom_call.1} parent=55 // pred_check
          %p419 = pneg %p179
        $region70: #{tpu_custom_call.1} parent=55 // pred_check_branch
          %421 = sbr.rel (%p419) target = $region72
        $region71: #{tpu_custom_call.1} parent=55 // pred_region
          %422 = dma.done [#allocation10], 8192
        $region72: #{tpu_custom_call.1} parent=55 // pred_fallthru
          _
        // Predicated region
        $region73: #{tpu_custom_call.1} parent=55 // pred_check
          %p423 = pneg %p221
        $region74: #{tpu_custom_call.1} parent=55 // pred_check_branch
          %425 = sbr.rel (%p423) target = $region76
        $region75: #{tpu_custom_call.1} parent=55 // pred_region
          %426 = dma.done [#allocation10], 2048
        $region76: #{tpu_custom_call.1} parent=55 // pred_fallthru
          _
        %p427 = pneg %p59
        %p428 = pneg %p56
        %s429 = sand.u32 %s26, 1
        %s430 = scalar_lea.sflag [#allocation7], %s429
        %s431 = sand.u32 %s72, 1
        %s432 = smul.addr %s431, 512
        %s433 = scalar_lea.vmem [#allocation6], %s432
        %p434 = pneg %p85
        %p435 = pneg %p82
        %s436 = smul.u32 2, %s31
        %p437 = scmp.lt.s32.totalorder %s436, 3
        %s438 = scalar_select %p437, %s436, 3
        %s439 = scalar_lea.vmem %s2, %s438
        %p440 = pneg %p111
        %p441 = pneg %p108
        %s442 = sand.u32 %s26, 1
        %s443 = scalar_lea.sflag [#allocation7], %s442
        %s444 = sand.u32 %s124, 1
        %s445 = smul.addr %s444, 512
        %s446 = scalar_lea.vmem [#allocation8], %s445
        %p447 = pneg %p137
        %p448 = pneg %p134
        %p449 = pneg %p158
        %p450 = pneg %p155
        %p451 = pneg %p179
        %p452 = pneg %p176
        %p453 = pneg %p200
        %p454 = pneg %p197
        %p455 = pneg %p221
        %p456 = pneg %p218
        %p457 = pneg %p242
        %p458 = pneg %p239
        %p459 = pneg %p268
        %p460 = pneg %p265
        %s461 = smul.u32 2, %s30
        %s462 = smul.u32 2, %s31
        %p463 = scmp.lt.s32.totalorder %s462, 3
        %s464 = scalar_select %p463, %s462, 3
        %s465 = scalar_lea.vmem %s2, %s464
        %s466 = smul.u32 2, %s31
        %s467 = smul.u32 32, %s31
        %s468 = smul.u32 2, %s30
        %p470 = scmp.eq.s32.totalorder %s31, 0
        // Predicated region
        $region77: #{tpu_custom_call.1} parent=55 // pred_check
          %p471 = pneg %p470
        $region78: #{tpu_custom_call.1} parent=55 // pred_check_branch
          %473 = sbr.rel (%p471) target = $region80
        $region79: #{tpu_custom_call.1} parent=55 // pred_region
          %474 = vst [vmem:[#allocation2] sm:$0xff] 0.0
          %475 = vst [vmem:[#allocation2 + $0x8] sm:$0xff] 0.0
          %476 = vst [vmem:[#allocation2 + $0x10] sm:$0xff] 0.0
          %477 = vst [vmem:[#allocation2 + $0x18] sm:$0xff] 0.0
          %478 = vst [vmem:[#allocation2 + $0x20] sm:$0xff] 0.0
          %479 = vst [vmem:[#allocation2 + $0x28] sm:$0xff] 0.0
          %480 = vst [vmem:[#allocation2 + $0x30] sm:$0xff] 0.0
          %481 = vst [vmem:[#allocation2 + $0x38] sm:$0xff] 0.0
        $region80: #{tpu_custom_call.1} parent=55 // pred_fallthru
          _
        %v482 = vld [vmem:[#allocation3] sm:$0xff]
        %v483 = vld [vmem:[#allocation3 + $0x8] sm:$0xff]
        %v484 = vld [vmem:[#allocation3 + $0x10] sm:$0xff]
        %v485 = vld [vmem:[#allocation3 + $0x18] sm:$0xff]
        %v486 = vld [vmem:[%s405] sm:$0xff]
        %v487 = vld [vmem:[%s405 + $0x8] sm:$0xff]
        %v488 = vld [vmem:[%s405 + $0x10] sm:$0xff]
        %v489 = vld [vmem:[%s405 + $0x18] sm:$0xff]
        %v490 = vld [vmem:[%s405 + $0x20] sm:$0xff]
        %v491 = vld [vmem:[%s405 + $0x28] sm:$0xff]
        %v492 = vld [vmem:[%s405 + $0x30] sm:$0xff]
        %v493 = vld [vmem:[%s405 + $0x38] sm:$0xff]
        %v494 = vld [vmem:[%s405 + $0x40] sm:$0xff]
        %v495 = vld [vmem:[%s405 + $0x48] sm:$0xff]
        %v496 = vld [vmem:[%s405 + $0x50] sm:$0xff]
        %v497 = vld [vmem:[%s405 + $0x58] sm:$0xff]
        %v498 = vld [vmem:[%s405 + $0x60] sm:$0xff]
        %v499 = vld [vmem:[%s405 + $0x68] sm:$0xff]
        %v500 = vld [vmem:[%s405 + $0x70] sm:$0xff]
        %v501 = vld [vmem:[%s405 + $0x78] sm:$0xff]
        %v502 = vld [vmem:[%s405 + $0x80] sm:$0xff]
        %v503 = vld [vmem:[%s405 + $0x88] sm:$0xff]
        %v504 = vld [vmem:[%s405 + $0x90] sm:$0xff]
        %v505 = vld [vmem:[%s405 + $0x98] sm:$0xff]
        %v506 = vld [vmem:[%s405 + $0xa0] sm:$0xff]
        %v507 = vld [vmem:[%s405 + $0xa8] sm:$0xff]
        %v508 = vld [vmem:[%s405 + $0xb0] sm:$0xff]
        %v509 = vld [vmem:[%s405 + $0xb8] sm:$0xff]
        %v510 = vld [vmem:[%s405 + $0xc0] sm:$0xff]
        %v511 = vld [vmem:[%s405 + $0xc8] sm:$0xff]
        %v512 = vld [vmem:[%s405 + $0xd0] sm:$0xff]
        %v513 = vld [vmem:[%s405 + $0xd8] sm:$0xff]
        %v514 = vld [vmem:[%s405 + $0xe0] sm:$0xff]
        %v515 = vld [vmem:[%s405 + $0xe8] sm:$0xff]
        %v516 = vld [vmem:[%s405 + $0xf0] sm:$0xff]
        %v517 = vld [vmem:[%s405 + $0xf8] sm:$0xff]
        %v518 = vld [vmem:[%s405 + $0x100] sm:$0xff]
        %v519 = vld [vmem:[%s405 + $0x108] sm:$0xff]
        %v520 = vld [vmem:[%s405 + $0x110] sm:$0xff]
        %v521 = vld [vmem:[%s405 + $0x118] sm:$0xff]
        %v522 = vld [vmem:[%s405 + $0x120] sm:$0xff]
        %v523 = vld [vmem:[%s405 + $0x128] sm:$0xff]
        %v524 = vld [vmem:[%s405 + $0x130] sm:$0xff]
        %v525 = vld [vmem:[%s405 + $0x138] sm:$0xff]
        %v526 = vld [vmem:[%s405 + $0x140] sm:$0xff]
        %v527 = vld [vmem:[%s405 + $0x148] sm:$0xff]
        %v528 = vld [vmem:[%s405 + $0x150] sm:$0xff]
        %v529 = vld [vmem:[%s405 + $0x158] sm:$0xff]
        %v530 = vld [vmem:[%s405 + $0x160] sm:$0xff]
        %v531 = vld [vmem:[%s405 + $0x168] sm:$0xff]
        %v532 = vld [vmem:[%s405 + $0x170] sm:$0xff]
        %v533 = vld [vmem:[%s405 + $0x178] sm:$0xff]
        %v534 = vld [vmem:[%s405 + $0x180] sm:$0xff]
        %v535 = vld [vmem:[%s405 + $0x188] sm:$0xff]
        %v536 = vld [vmem:[%s405 + $0x190] sm:$0xff]
        %v537 = vld [vmem:[%s405 + $0x198] sm:$0xff]
        %v538 = vld [vmem:[%s405 + $0x1a0] sm:$0xff]
        %v539 = vld [vmem:[%s405 + $0x1a8] sm:$0xff]
        %v540 = vld [vmem:[%s405 + $0x1b0] sm:$0xff]
        %v541 = vld [vmem:[%s405 + $0x1b8] sm:$0xff]
        %v542 = vld [vmem:[%s405 + $0x1c0] sm:$0xff]
        %v543 = vld [vmem:[%s405 + $0x1c8] sm:$0xff]
        %v544 = vld [vmem:[%s405 + $0x1d0] sm:$0xff]
        %v545 = vld [vmem:[%s405 + $0x1d8] sm:$0xff]
        %v546 = vld [vmem:[%s405 + $0x1e0] sm:$0xff]
        %v547 = vld [vmem:[%s405 + $0x1e8] sm:$0xff]
        %v548 = vld [vmem:[%s405 + $0x1f0] sm:$0xff]
        %v549 = vld [vmem:[%s405 + $0x1f8] sm:$0xff]
        %v550 = vld [vmem:[%s465] sm:$0x3]
        %v552 = vlaneseq
        %v553 = vshrl.u32 %v552, 7
        %v554 = vsub.s32 0, %v553
        %v555 = vrot.slane %v550, %v554
        %v556 = vlaneseq
        %v557 = vshrl.u32 %v556, 7
        %v558 = vsub.s32 1, %v557
        %v559 = vrot.slane %v550, %v558
        %v566 = vunpack.c.l.b16 %v482
        %v567 = vunpack.c.h.b16 %v482
        %v568 = vunpack.c.l.b16 %v483
        %v569 = vunpack.c.h.b16 %v483
        %v570 = vunpack.c.l.b16 %v484
        %v571 = vunpack.c.h.b16 %v484
        %v572 = vunpack.c.l.b16 %v485
        %v573 = vunpack.c.h.b16 %v485
        %v574 = vpack.c.b16 %v570, %v566
        %v575 = vpack.c.b16 %v571, %v567
        %v576 = vpack.c.b16 %v572, %v568
        %v577 = vpack.c.b16 %v573, %v569
        %v646 = vunpack.c.l.b16 %v486
        %v647 = vunpack.c.h.b16 %v486
        %v648 = vunpack.c.l.b16 %v487
        %v649 = vunpack.c.h.b16 %v487
        %v650 = vunpack.c.l.b16 %v488
        %v651 = vunpack.c.h.b16 %v488
        %v652 = vunpack.c.l.b16 %v489
        %v653 = vunpack.c.h.b16 %v489
        %v654 = vunpack.c.l.b16 %v490
        %v655 = vunpack.c.h.b16 %v490
        %v656 = vunpack.c.l.b16 %v491
        %v657 = vunpack.c.h.b16 %v491
        %v658 = vunpack.c.l.b16 %v492
        %v659 = vunpack.c.h.b16 %v492
        %v660 = vunpack.c.l.b16 %v493
        %v661 = vunpack.c.h.b16 %v493
        %v662 = vunpack.c.l.b16 %v494
        %v663 = vunpack.c.h.b16 %v494
        %v664 = vunpack.c.l.b16 %v495
        %v665 = vunpack.c.h.b16 %v495
        %v666 = vunpack.c.l.b16 %v496
        %v667 = vunpack.c.h.b16 %v496
        %v668 = vunpack.c.l.b16 %v497
        %v669 = vunpack.c.h.b16 %v497
        %v670 = vunpack.c.l.b16 %v498
        %v671 = vunpack.c.h.b16 %v498
        %v672 = vunpack.c.l.b16 %v499
        %v673 = vunpack.c.h.b16 %v499
        %v674 = vunpack.c.l.b16 %v500
        %v675 = vunpack.c.h.b16 %v500
        %v676 = vunpack.c.l.b16 %v501
        %v677 = vunpack.c.h.b16 %v501
        %v678 = vunpack.c.l.b16 %v502
        %v679 = vunpack.c.h.b16 %v502
        %v680 = vunpack.c.l.b16 %v503
        %v681 = vunpack.c.h.b16 %v503
        %v682 = vunpack.c.l.b16 %v504
        %v683 = vunpack.c.h.b16 %v504
        %v684 = vunpack.c.l.b16 %v505
        %v685 = vunpack.c.h.b16 %v505
        %v686 = vunpack.c.l.b16 %v506
        %v687 = vunpack.c.h.b16 %v506
        %v688 = vunpack.c.l.b16 %v507
        %v689 = vunpack.c.h.b16 %v507
        %v690 = vunpack.c.l.b16 %v508
        %v691 = vunpack.c.h.b16 %v508
        %v692 = vunpack.c.l.b16 %v509
        %v693 = vunpack.c.h.b16 %v509
        %v694 = vunpack.c.l.b16 %v510
        %v695 = vunpack.c.h.b16 %v510
        %v696 = vunpack.c.l.b16 %v511
        %v697 = vunpack.c.h.b16 %v511
        %v698 = vunpack.c.l.b16 %v512
        %v699 = vunpack.c.h.b16 %v512
        %v700 = vunpack.c.l.b16 %v513
        %v701 = vunpack.c.h.b16 %v513
        %v702 = vunpack.c.l.b16 %v514
        %v703 = vunpack.c.h.b16 %v514
        %v704 = vunpack.c.l.b16 %v515
        %v705 = vunpack.c.h.b16 %v515
        %v706 = vunpack.c.l.b16 %v516
        %v707 = vunpack.c.h.b16 %v516
        %v708 = vunpack.c.l.b16 %v517
        %v709 = vunpack.c.h.b16 %v517
        %v710 = vunpack.c.l.b16 %v518
        %v711 = vunpack.c.h.b16 %v518
        %v712 = vunpack.c.l.b16 %v519
        %v713 = vunpack.c.h.b16 %v519
        %v714 = vunpack.c.l.b16 %v520
        %v715 = vunpack.c.h.b16 %v520
        %v716 = vunpack.c.l.b16 %v521
        %v717 = vunpack.c.h.b16 %v521
        %v718 = vunpack.c.l.b16 %v522
        %v719 = vunpack.c.h.b16 %v522
        %v720 = vunpack.c.l.b16 %v523
        %v721 = vunpack.c.h.b16 %v523
        %v722 = vunpack.c.l.b16 %v524
        %v723 = vunpack.c.h.b16 %v524
        %v724 = vunpack.c.l.b16 %v525
        %v725 = vunpack.c.h.b16 %v525
        %v726 = vunpack.c.l.b16 %v526
        %v727 = vunpack.c.h.b16 %v526
        %v728 = vunpack.c.l.b16 %v527
        %v729 = vunpack.c.h.b16 %v527
        %v730 = vunpack.c.l.b16 %v528
        %v731 = vunpack.c.h.b16 %v528
        %v732 = vunpack.c.l.b16 %v529
        %v733 = vunpack.c.h.b16 %v529
        %v734 = vunpack.c.l.b16 %v530
        %v735 = vunpack.c.h.b16 %v530
        %v736 = vunpack.c.l.b16 %v531
        %v737 = vunpack.c.h.b16 %v531
        %v738 = vunpack.c.l.b16 %v532
        %v739 = vunpack.c.h.b16 %v532
        %v740 = vunpack.c.l.b16 %v533
        %v741 = vunpack.c.h.b16 %v533
        %v742 = vunpack.c.l.b16 %v534
        %v743 = vunpack.c.h.b16 %v534
        %v744 = vunpack.c.l.b16 %v535
        %v745 = vunpack.c.h.b16 %v535
        %v746 = vunpack.c.l.b16 %v536
        %v747 = vunpack.c.h.b16 %v536
        %v748 = vunpack.c.l.b16 %v537
        %v749 = vunpack.c.h.b16 %v537
        %v750 = vunpack.c.l.b16 %v538
        %v751 = vunpack.c.h.b16 %v538
        %v752 = vunpack.c.l.b16 %v539
        %v753 = vunpack.c.h.b16 %v539
        %v754 = vunpack.c.l.b16 %v540
        %v755 = vunpack.c.h.b16 %v540
        %v756 = vunpack.c.l.b16 %v541
        %v757 = vunpack.c.h.b16 %v541
        %v758 = vunpack.c.l.b16 %v542
        %v759 = vunpack.c.h.b16 %v542
        %v760 = vunpack.c.l.b16 %v543
        %v761 = vunpack.c.h.b16 %v543
        %v762 = vunpack.c.l.b16 %v544
        %v763 = vunpack.c.h.b16 %v544
        %v764 = vunpack.c.l.b16 %v545
        %v765 = vunpack.c.h.b16 %v545
        %v766 = vunpack.c.l.b16 %v546
        %v767 = vunpack.c.h.b16 %v546
        %v768 = vunpack.c.l.b16 %v547
        %v769 = vunpack.c.h.b16 %v547
        %v770 = vunpack.c.l.b16 %v548
        %v771 = vunpack.c.h.b16 %v548
        %v772 = vunpack.c.l.b16 %v549
        %v773 = vunpack.c.h.b16 %v549
        %v774 = vpack.c.b16 %v648, %v646
        %v775 = vpack.c.b16 %v649, %v647
        %v776 = vpack.c.b16 %v652, %v650
        %v777 = vpack.c.b16 %v653, %v651
        %v778 = vpack.c.b16 %v656, %v654
        %v779 = vpack.c.b16 %v657, %v655
        %v780 = vpack.c.b16 %v660, %v658
        %v781 = vpack.c.b16 %v661, %v659
        %v782 = vpack.c.b16 %v664, %v662
        %v783 = vpack.c.b16 %v665, %v663
        %v784 = vpack.c.b16 %v668, %v666
        %v785 = vpack.c.b16 %v669, %v667
        %v786 = vpack.c.b16 %v672, %v670
        %v787 = vpack.c.b16 %v673, %v671
        %v788 = vpack.c.b16 %v676, %v674
        %v789 = vpack.c.b16 %v677, %v675
        %v790 = vpack.c.b16 %v680, %v678
        %v791 = vpack.c.b16 %v681, %v679
        %v792 = vpack.c.b16 %v684, %v682
        %v793 = vpack.c.b16 %v685, %v683
        %v794 = vpack.c.b16 %v688, %v686
        %v795 = vpack.c.b16 %v689, %v687
        %v796 = vpack.c.b16 %v692, %v690
        %v797 = vpack.c.b16 %v693, %v691
        %v798 = vpack.c.b16 %v696, %v694
        %v799 = vpack.c.b16 %v697, %v695
        %v800 = vpack.c.b16 %v700, %v698
        %v801 = vpack.c.b16 %v701, %v699
        %v802 = vpack.c.b16 %v704, %v702
        %v803 = vpack.c.b16 %v705, %v703
        %v804 = vpack.c.b16 %v708, %v706
        %v805 = vpack.c.b16 %v709, %v707
        %v806 = vpack.c.b16 %v712, %v710
        %v807 = vpack.c.b16 %v713, %v711
        %v808 = vpack.c.b16 %v716, %v714
        %v809 = vpack.c.b16 %v717, %v715
        %v810 = vpack.c.b16 %v720, %v718
        %v811 = vpack.c.b16 %v721, %v719
        %v812 = vpack.c.b16 %v724, %v722
        %v813 = vpack.c.b16 %v725, %v723
        %v814 = vpack.c.b16 %v728, %v726
        %v815 = vpack.c.b16 %v729, %v727
        %v816 = vpack.c.b16 %v732, %v730
        %v817 = vpack.c.b16 %v733, %v731
        %v818 = vpack.c.b16 %v736, %v734
        %v819 = vpack.c.b16 %v737, %v735
        %v820 = vpack.c.b16 %v740, %v738
        %v821 = vpack.c.b16 %v741, %v739
        %v822 = vpack.c.b16 %v744, %v742
        %v823 = vpack.c.b16 %v745, %v743
        %v824 = vpack.c.b16 %v748, %v746
        %v825 = vpack.c.b16 %v749, %v747
        %v826 = vpack.c.b16 %v752, %v750
        %v827 = vpack.c.b16 %v753, %v751
        %v828 = vpack.c.b16 %v756, %v754
        %v829 = vpack.c.b16 %v757, %v755
        %v830 = vpack.c.b16 %v760, %v758
        %v831 = vpack.c.b16 %v761, %v759
        %v832 = vpack.c.b16 %v764, %v762
        %v833 = vpack.c.b16 %v765, %v763
        %v834 = vpack.c.b16 %v768, %v766
        %v835 = vpack.c.b16 %v769, %v767
        %v836 = vpack.c.b16 %v772, %v770
        %v837 = vpack.c.b16 %v773, %v771
        %902 = vmatprep.subr.bf16.mxu0 %v775
        %903 = vmatpush1.bf16.msra.mxu0 %v774
        %904 = vmatprep.subr.bf16.mxu0 %v777
        %905 = vmatpush1.bf16.msra.mxu0 %v776
        %906 = vmatprep.subr.bf16.mxu0 %v779
        %907 = vmatpush1.bf16.msra.mxu0 %v778
        %908 = vmatprep.subr.bf16.mxu0 %v781
        %909 = vmatpush1.bf16.msra.mxu0 %v780
        %910 = vmatprep.subr.bf16.mxu0 %v783
        %911 = vmatpush1.bf16.msra.mxu0 %v782
        %912 = vmatprep.subr.bf16.mxu0 %v785
        %913 = vmatpush1.bf16.msra.mxu0 %v784
        %914 = vmatprep.subr.bf16.mxu0 %v787
        %915 = vmatpush1.bf16.msra.mxu0 %v786
        %916 = vmatprep.subr.bf16.mxu0 %v789
        %917 = vmatpush1.bf16.msra.mxu0 %v788
        %918 = vmatprep.subr.bf16.mxu0 %v791
        %919 = vmatpush1.bf16.msra.mxu0 %v790
        %920 = vmatprep.subr.bf16.mxu0 %v793
        %921 = vmatpush1.bf16.msra.mxu0 %v792
        %922 = vmatprep.subr.bf16.mxu0 %v795
        %923 = vmatpush1.bf16.msra.mxu0 %v794
        %924 = vmatprep.subr.bf16.mxu0 %v797
        %925 = vmatpush1.bf16.msra.mxu0 %v796
        %926 = vmatprep.subr.bf16.mxu0 %v799
        %927 = vmatpush1.bf16.msra.mxu0 %v798
        %928 = vmatprep.subr.bf16.mxu0 %v801
        %929 = vmatpush1.bf16.msra.mxu0 %v800
        %930 = vmatprep.subr.bf16.mxu0 %v803
        %931 = vmatpush1.bf16.msra.mxu0 %v802
        %932 = vmatprep.subr.bf16.mxu0 %v805
        %933 = vmatpush1.bf16.msra.mxu0 %v804
        %934 = vmatprep.mubr.bf16.mxu0 %v575
        %935 = vmatmul.mubr.bf16.gmra.mrb[0].mxu0 %v574
        %v936 = vpop.f32.mrb[0].mxu0
        %v937 = vadd.f32 %v555, %v936
        %v938 = vpop.f32.mrb[0].mxu0
        %v939 = vadd.f32 %v559, %v938
        %v940 = vpop.f32.mrb[0].mxu0
        %v941 = vadd.f32 %v555, %v940
        %v942 = vpop.f32.mrb[0].mxu0
        %v943 = vadd.f32 %v559, %v942
        %944 = vdwg.mxu0
        %945 = vmatprep.subr.bf16.mxu0 %v807
        %946 = vmatpush1.bf16.msra.mxu0 %v806
        %947 = vmatprep.subr.bf16.mxu0 %v809
        %948 = vmatpush1.bf16.msra.mxu0 %v808
        %949 = vmatprep.subr.bf16.mxu0 %v811
        %950 = vmatpush1.bf16.msra.mxu0 %v810
        %951 = vmatprep.subr.bf16.mxu0 %v813
        %952 = vmatpush1.bf16.msra.mxu0 %v812
        %953 = vmatprep.subr.bf16.mxu0 %v815
        %954 = vmatpush1.bf16.msra.mxu0 %v814
        %955 = vmatprep.subr.bf16.mxu0 %v817
        %956 = vmatpush1.bf16.msra.mxu0 %v816
        %957 = vmatprep.subr.bf16.mxu0 %v819
        %958 = vmatpush1.bf16.msra.mxu0 %v818
        %959 = vmatprep.subr.bf16.mxu0 %v821
        %960 = vmatpush1.bf16.msra.mxu0 %v820
        %961 = vmatprep.subr.bf16.mxu0 %v823
        %962 = vmatpush1.bf16.msra.mxu0 %v822
        %963 = vmatprep.subr.bf16.mxu0 %v825
        %964 = vmatpush1.bf16.msra.mxu0 %v824
        %965 = vmatprep.subr.bf16.mxu0 %v827
        %966 = vmatpush1.bf16.msra.mxu0 %v826
        %967 = vmatprep.subr.bf16.mxu0 %v829
        %968 = vmatpush1.bf16.msra.mxu0 %v828
        %969 = vmatprep.subr.bf16.mxu0 %v831
        %970 = vmatpush1.bf16.msra.mxu0 %v830
        %971 = vmatprep.subr.bf16.mxu0 %v833
        %972 = vmatpush1.bf16.msra.mxu0 %v832
        %973 = vmatprep.subr.bf16.mxu0 %v835
        %974 = vmatpush1.bf16.msra.mxu0 %v834
        %975 = vmatprep.subr.bf16.mxu0 %v837
        %976 = vmatpush1.bf16.msra.mxu0 %v836
        %977 = vmatprep.mubr.bf16.mxu0 %v577
        %978 = vmatmul.mubr.bf16.gmra.mrb[0].mxu0 %v576
        %v979 = vpop.f32.mrb[0].mxu0
        %v980 = vadd.f32 %v937, %v979
        %v981 = vpop.f32.mrb[0].mxu0
        %v982 = vadd.f32 %v939, %v981
        %v983 = vpop.f32.mrb[0].mxu0
        %v984 = vadd.f32 %v941, %v983
        %v985 = vpop.f32.mrb[0].mxu0
        %v986 = vadd.f32 %v943, %v985
        %987 = vdwg.mxu0
        %v988 = vxor.u32 %v980, 2147483648
        %v989 = vxor.u32 %v982, 2147483648
        %v990 = vxor.u32 %v984, 2147483648
        %v991 = vxor.u32 %v986, 2147483648
        %v992 = vmul.f32 %v988, 1.442695
        %v993 = vpow.pop %v992
        %v994 = vmul.f32 %v989, 1.442695
        %v995 = vpow.pop %v994
        %v996 = vmul.f32 %v990, 1.442695
        %v997 = vpow.pop %v996
        %v998 = vmul.f32 %v991, 1.442695
        %v999 = vpow.pop %v998
        %v1000 = vadd.f32 %v993, 1.0
        %v1001 = vadd.f32 %v995, 1.0
        %v1002 = vadd.f32 %v997, 1.0
        %v1003 = vadd.f32 %v999, 1.0
        %v1004 = vrcp.pop %v1000
        %v1005 = vmul.f32 1.0, %v1004
        %v1006 = vrcp.pop %v1001
        %v1007 = vmul.f32 1.0, %v1006
        %v1008 = vrcp.pop %v1002
        %v1009 = vmul.f32 1.0, %v1008
        %v1010 = vrcp.pop %v1003
        %v1011 = vmul.f32 1.0, %v1010
        %s1012 = smul.u32 %s31, 256
        %s1013 = sshra.s32 %s1012, 7
        %s1014 = sand.u32 %s1012, 127
        %s1015 = smul.addr %s1013, 4
        %s1016 = scalar_lea.vmem [#allocation3], %s1015
        %v1017 = vld [vmem:[%s1016] sm:$0xff]
        %v1018 = vld [vmem:[%s1016 + $0x10] sm:$0xff]
        %v1019 = vunpack.c.l.bf16 %v1017
        %v1020 = vunpack.c.h.bf16 %v1017
        %v1021 = vunpack.c.l.bf16 %v1018
        %v1022 = vunpack.c.h.bf16 %v1018
        %v1023 = vmul.f32 %v1019, %v1005
        %v1024 = vmul.f32 %v1020, %v1007
        %v1025 = vmul.f32 %v1021, %v1009
        %v1026 = vmul.f32 %v1022, %v1011
        %v1027 = vpack.c.bf16 %v1025, %v1023
        %v1028 = vpack.c.bf16 %v1026, %v1024
        %v1029 = vld [vmem:[#allocation2] sm:$0xff]
        %v1030 = vld [vmem:[#allocation2 + $0x8] sm:$0xff]
        %v1031 = vld [vmem:[#allocation2 + $0x10] sm:$0xff]
        %v1032 = vld [vmem:[#allocation2 + $0x18] sm:$0xff]
        %v1033 = vld [vmem:[#allocation2 + $0x20] sm:$0xff]
        %v1034 = vld [vmem:[#allocation2 + $0x28] sm:$0xff]
        %v1035 = vld [vmem:[#allocation2 + $0x30] sm:$0xff]
        %v1036 = vld [vmem:[#allocation2 + $0x38] sm:$0xff]
        %v1037 = vld [vmem:[%s414] sm:$0xff]
        %v1038 = vld [vmem:[%s414 + $0x8] sm:$0xff]
        %v1039 = vld [vmem:[%s414 + $0x10] sm:$0xff]
        %v1040 = vld [vmem:[%s414 + $0x18] sm:$0xff]
        %v1041 = vld [vmem:[%s414 + $0x20] sm:$0xff]
        %v1042 = vld [vmem:[%s414 + $0x28] sm:$0xff]
        %v1043 = vld [vmem:[%s414 + $0x30] sm:$0xff]
        %v1044 = vld [vmem:[%s414 + $0x38] sm:$0xff]
        %v1045 = vld [vmem:[%s414 + $0x40] sm:$0xff]
        %v1046 = vld [vmem:[%s414 + $0x48] sm:$0xff]
        %v1047 = vld [vmem:[%s414 + $0x50] sm:$0xff]
        %v1048 = vld [vmem:[%s414 + $0x58] sm:$0xff]
        %v1049 = vld [vmem:[%s414 + $0x60] sm:$0xff]
        %v1050 = vld [vmem:[%s414 + $0x68] sm:$0xff]
        %v1051 = vld [vmem:[%s414 + $0x70] sm:$0xff]
        %v1052 = vld [vmem:[%s414 + $0x78] sm:$0xff]
        %v1053 = vld [vmem:[%s414 + $0x80] sm:$0xff]
        %v1054 = vld [vmem:[%s414 + $0x88] sm:$0xff]
        %v1055 = vld [vmem:[%s414 + $0x90] sm:$0xff]
        %v1056 = vld [vmem:[%s414 + $0x98] sm:$0xff]
        %v1057 = vld [vmem:[%s414 + $0xa0] sm:$0xff]
        %v1058 = vld [vmem:[%s414 + $0xa8] sm:$0xff]
        %v1059 = vld [vmem:[%s414 + $0xb0] sm:$0xff]
        %v1060 = vld [vmem:[%s414 + $0xb8] sm:$0xff]
        %v1061 = vld [vmem:[%s414 + $0xc0] sm:$0xff]
        %v1062 = vld [vmem:[%s414 + $0xc8] sm:$0xff]
        %v1063 = vld [vmem:[%s414 + $0xd0] sm:$0xff]
        %v1064 = vld [vmem:[%s414 + $0xd8] sm:$0xff]
        %v1065 = vld [vmem:[%s414 + $0xe0] sm:$0xff]
        %v1066 = vld [vmem:[%s414 + $0xe8] sm:$0xff]
        %v1067 = vld [vmem:[%s414 + $0xf0] sm:$0xff]
        %v1068 = vld [vmem:[%s414 + $0xf8] sm:$0xff]
        %v1069 = vld [vmem:[%s414 + $0x100] sm:$0xff]
        %v1070 = vld [vmem:[%s414 + $0x108] sm:$0xff]
        %v1071 = vld [vmem:[%s414 + $0x110] sm:$0xff]
        %v1072 = vld [vmem:[%s414 + $0x118] sm:$0xff]
        %v1073 = vld [vmem:[%s414 + $0x120] sm:$0xff]
        %v1074 = vld [vmem:[%s414 + $0x128] sm:$0xff]
        %v1075 = vld [vmem:[%s414 + $0x130] sm:$0xff]
        %v1076 = vld [vmem:[%s414 + $0x138] sm:$0xff]
        %v1077 = vld [vmem:[%s414 + $0x140] sm:$0xff]
        %v1078 = vld [vmem:[%s414 + $0x148] sm:$0xff]
        %v1079 = vld [vmem:[%s414 + $0x150] sm:$0xff]
        %v1080 = vld [vmem:[%s414 + $0x158] sm:$0xff]
        %v1081 = vld [vmem:[%s414 + $0x160] sm:$0xff]
        %v1082 = vld [vmem:[%s414 + $0x168] sm:$0xff]
        %v1083 = vld [vmem:[%s414 + $0x170] sm:$0xff]
        %v1084 = vld [vmem:[%s414 + $0x178] sm:$0xff]
        %v1085 = vld [vmem:[%s414 + $0x180] sm:$0xff]
        %v1086 = vld [vmem:[%s414 + $0x188] sm:$0xff]
        %v1087 = vld [vmem:[%s414 + $0x190] sm:$0xff]
        %v1088 = vld [vmem:[%s414 + $0x198] sm:$0xff]
        %v1089 = vld [vmem:[%s414 + $0x1a0] sm:$0xff]
        %v1090 = vld [vmem:[%s414 + $0x1a8] sm:$0xff]
        %v1091 = vld [vmem:[%s414 + $0x1b0] sm:$0xff]
        %v1092 = vld [vmem:[%s414 + $0x1b8] sm:$0xff]
        %v1093 = vld [vmem:[%s414 + $0x1c0] sm:$0xff]
        %v1094 = vld [vmem:[%s414 + $0x1c8] sm:$0xff]
        %v1095 = vld [vmem:[%s414 + $0x1d0] sm:$0xff]
        %v1096 = vld [vmem:[%s414 + $0x1d8] sm:$0xff]
        %v1097 = vld [vmem:[%s414 + $0x1e0] sm:$0xff]
        %v1098 = vld [vmem:[%s414 + $0x1e8] sm:$0xff]
        %v1099 = vld [vmem:[%s414 + $0x1f0] sm:$0xff]
        %v1100 = vld [vmem:[%s414 + $0x1f8] sm:$0xff]
        %v1165 = vunpack.c.l.b16 %v1037
        %v1166 = vunpack.c.h.b16 %v1037
        %v1167 = vunpack.c.l.b16 %v1038
        %v1168 = vunpack.c.h.b16 %v1038
        %v1169 = vunpack.c.l.b16 %v1039
        %v1170 = vunpack.c.h.b16 %v1039
        %v1171 = vunpack.c.l.b16 %v1040
        %v1172 = vunpack.c.h.b16 %v1040
        %v1173 = vunpack.c.l.b16 %v1041
        %v1174 = vunpack.c.h.b16 %v1041
        %v1175 = vunpack.c.l.b16 %v1042
        %v1176 = vunpack.c.h.b16 %v1042
        %v1177 = vunpack.c.l.b16 %v1043
        %v1178 = vunpack.c.h.b16 %v1043
        %v1179 = vunpack.c.l.b16 %v1044
        %v1180 = vunpack.c.h.b16 %v1044
        %v1181 = vunpack.c.l.b16 %v1045
        %v1182 = vunpack.c.h.b16 %v1045
        %v1183 = vunpack.c.l.b16 %v1046
        %v1184 = vunpack.c.h.b16 %v1046
        %v1185 = vunpack.c.l.b16 %v1047
        %v1186 = vunpack.c.h.b16 %v1047
        %v1187 = vunpack.c.l.b16 %v1048
        %v1188 = vunpack.c.h.b16 %v1048
        %v1189 = vunpack.c.l.b16 %v1049
        %v1190 = vunpack.c.h.b16 %v1049
        %v1191 = vunpack.c.l.b16 %v1050
        %v1192 = vunpack.c.h.b16 %v1050
        %v1193 = vunpack.c.l.b16 %v1051
        %v1194 = vunpack.c.h.b16 %v1051
        %v1195 = vunpack.c.l.b16 %v1052
        %v1196 = vunpack.c.h.b16 %v1052
        %v1197 = vunpack.c.l.b16 %v1053
        %v1198 = vunpack.c.h.b16 %v1053
        %v1199 = vunpack.c.l.b16 %v1054
        %v1200 = vunpack.c.h.b16 %v1054
        %v1201 = vunpack.c.l.b16 %v1055
        %v1202 = vunpack.c.h.b16 %v1055
        %v1203 = vunpack.c.l.b16 %v1056
        %v1204 = vunpack.c.h.b16 %v1056
        %v1205 = vunpack.c.l.b16 %v1057
        %v1206 = vunpack.c.h.b16 %v1057
        %v1207 = vunpack.c.l.b16 %v1058
        %v1208 = vunpack.c.h.b16 %v1058
        %v1209 = vunpack.c.l.b16 %v1059
        %v1210 = vunpack.c.h.b16 %v1059
        %v1211 = vunpack.c.l.b16 %v1060
        %v1212 = vunpack.c.h.b16 %v1060
        %v1213 = vunpack.c.l.b16 %v1061
        %v1214 = vunpack.c.h.b16 %v1061
        %v1215 = vunpack.c.l.b16 %v1062
        %v1216 = vunpack.c.h.b16 %v1062
        %v1217 = vunpack.c.l.b16 %v1063
        %v1218 = vunpack.c.h.b16 %v1063
        %v1219 = vunpack.c.l.b16 %v1064
        %v1220 = vunpack.c.h.b16 %v1064
        %v1221 = vunpack.c.l.b16 %v1065
        %v1222 = vunpack.c.h.b16 %v1065
        %v1223 = vunpack.c.l.b16 %v1066
        %v1224 = vunpack.c.h.b16 %v1066
        %v1225 = vunpack.c.l.b16 %v1067
        %v1226 = vunpack.c.h.b16 %v1067
        %v1227 = vunpack.c.l.b16 %v1068
        %v1228 = vunpack.c.h.b16 %v1068
        %v1229 = vunpack.c.l.b16 %v1069
        %v1230 = vunpack.c.h.b16 %v1069
        %v1231 = vunpack.c.l.b16 %v1070
        %v1232 = vunpack.c.h.b16 %v1070
        %v1233 = vunpack.c.l.b16 %v1071
        %v1234 = vunpack.c.h.b16 %v1071
        %v1235 = vunpack.c.l.b16 %v1072
        %v1236 = vunpack.c.h.b16 %v1072
        %v1237 = vunpack.c.l.b16 %v1073
        %v1238 = vunpack.c.h.b16 %v1073
        %v1239 = vunpack.c.l.b16 %v1074
        %v1240 = vunpack.c.h.b16 %v1074
        %v1241 = vunpack.c.l.b16 %v1075
        %v1242 = vunpack.c.h.b16 %v1075
        %v1243 = vunpack.c.l.b16 %v1076
        %v1244 = vunpack.c.h.b16 %v1076
        %v1245 = vunpack.c.l.b16 %v1077
        %v1246 = vunpack.c.h.b16 %v1077
        %v1247 = vunpack.c.l.b16 %v1078
        %v1248 = vunpack.c.h.b16 %v1078
        %v1249 = vunpack.c.l.b16 %v1079
        %v1250 = vunpack.c.h.b16 %v1079
        %v1251 = vunpack.c.l.b16 %v1080
        %v1252 = vunpack.c.h.b16 %v1080
        %v1253 = vunpack.c.l.b16 %v1081
        %v1254 = vunpack.c.h.b16 %v1081
        %v1255 = vunpack.c.l.b16 %v1082
        %v1256 = vunpack.c.h.b16 %v1082
        %v1257 = vunpack.c.l.b16 %v1083
        %v1258 = vunpack.c.h.b16 %v1083
        %v1259 = vunpack.c.l.b16 %v1084
        %v1260 = vunpack.c.h.b16 %v1084
        %v1261 = vunpack.c.l.b16 %v1085
        %v1262 = vunpack.c.h.b16 %v1085
        %v1263 = vunpack.c.l.b16 %v1086
        %v1264 = vunpack.c.h.b16 %v1086
        %v1265 = vunpack.c.l.b16 %v1087
        %v1266 = vunpack.c.h.b16 %v1087
        %v1267 = vunpack.c.l.b16 %v1088
        %v1268 = vunpack.c.h.b16 %v1088
        %v1269 = vunpack.c.l.b16 %v1089
        %v1270 = vunpack.c.h.b16 %v1089
        %v1271 = vunpack.c.l.b16 %v1090
        %v1272 = vunpack.c.h.b16 %v1090
        %v1273 = vunpack.c.l.b16 %v1091
        %v1274 = vunpack.c.h.b16 %v1091
        %v1275 = vunpack.c.l.b16 %v1092
        %v1276 = vunpack.c.h.b16 %v1092
        %v1277 = vunpack.c.l.b16 %v1093
        %v1278 = vunpack.c.h.b16 %v1093
        %v1279 = vunpack.c.l.b16 %v1094
        %v1280 = vunpack.c.h.b16 %v1094
        %v1281 = vunpack.c.l.b16 %v1095
        %v1282 = vunpack.c.h.b16 %v1095
        %v1283 = vunpack.c.l.b16 %v1096
        %v1284 = vunpack.c.h.b16 %v1096
        %v1285 = vunpack.c.l.b16 %v1097
        %v1286 = vunpack.c.h.b16 %v1097
        %v1287 = vunpack.c.l.b16 %v1098
        %v1288 = vunpack.c.h.b16 %v1098
        %v1289 = vunpack.c.l.b16 %v1099
        %v1290 = vunpack.c.h.b16 %v1099
        %v1291 = vunpack.c.l.b16 %v1100
        %v1292 = vunpack.c.h.b16 %v1100
        %v1293 = vpack.c.b16 %v1169, %v1165
        %v1294 = vpack.c.b16 %v1170, %v1166
        %v1295 = vpack.c.b16 %v1171, %v1167
        %v1296 = vpack.c.b16 %v1172, %v1168
        %v1297 = vpack.c.b16 %v1177, %v1173
        %v1298 = vpack.c.b16 %v1178, %v1174
        %v1299 = vpack.c.b16 %v1179, %v1175
        %v1300 = vpack.c.b16 %v1180, %v1176
        %v1301 = vpack.c.b16 %v1185, %v1181
        %v1302 = vpack.c.b16 %v1186, %v1182
        %v1303 = vpack.c.b16 %v1187, %v1183
        %v1304 = vpack.c.b16 %v1188, %v1184
        %v1305 = vpack.c.b16 %v1193, %v1189
        %v1306 = vpack.c.b16 %v1194, %v1190
        %v1307 = vpack.c.b16 %v1195, %v1191
        %v1308 = vpack.c.b16 %v1196, %v1192
        %v1309 = vpack.c.b16 %v1201, %v1197
        %v1310 = vpack.c.b16 %v1202, %v1198
        %v1311 = vpack.c.b16 %v1203, %v1199
        %v1312 = vpack.c.b16 %v1204, %v1200
        %v1313 = vpack.c.b16 %v1209, %v1205
        %v1314 = vpack.c.b16 %v1210, %v1206
        %v1315 = vpack.c.b16 %v1211, %v1207
        %v1316 = vpack.c.b16 %v1212, %v1208
        %v1317 = vpack.c.b16 %v1217, %v1213
        %v1318 = vpack.c.b16 %v1218, %v1214
        %v1319 = vpack.c.b16 %v1219, %v1215
        %v1320 = vpack.c.b16 %v1220, %v1216
        %v1321 = vpack.c.b16 %v1225, %v1221
        %v1322 = vpack.c.b16 %v1226, %v1222
        %v1323 = vpack.c.b16 %v1227, %v1223
        %v1324 = vpack.c.b16 %v1228, %v1224
        %v1325 = vpack.c.b16 %v1233, %v1229
        %v1326 = vpack.c.b16 %v1234, %v1230
        %v1327 = vpack.c.b16 %v1235, %v1231
        %v1328 = vpack.c.b16 %v1236, %v1232
        %v1329 = vpack.c.b16 %v1241, %v1237
        %v1330 = vpack.c.b16 %v1242, %v1238
        %v1331 = vpack.c.b16 %v1243, %v1239
        %v1332 = vpack.c.b16 %v1244, %v1240
        %v1333 = vpack.c.b16 %v1249, %v1245
        %v1334 = vpack.c.b16 %v1250, %v1246
        %v1335 = vpack.c.b16 %v1251, %v1247
        %v1336 = vpack.c.b16 %v1252, %v1248
        %v1337 = vpack.c.b16 %v1257, %v1253
        %v1338 = vpack.c.b16 %v1258, %v1254
        %v1339 = vpack.c.b16 %v1259, %v1255
        %v1340 = vpack.c.b16 %v1260, %v1256
        %v1341 = vpack.c.b16 %v1265, %v1261
        %v1342 = vpack.c.b16 %v1266, %v1262
        %v1343 = vpack.c.b16 %v1267, %v1263
        %v1344 = vpack.c.b16 %v1268, %v1264
        %v1345 = vpack.c.b16 %v1273, %v1269
        %v1346 = vpack.c.b16 %v1274, %v1270
        %v1347 = vpack.c.b16 %v1275, %v1271
        %v1348 = vpack.c.b16 %v1276, %v1272
        %v1349 = vpack.c.b16 %v1281, %v1277
        %v1350 = vpack.c.b16 %v1282, %v1278
        %v1351 = vpack.c.b16 %v1283, %v1279
        %v1352 = vpack.c.b16 %v1284, %v1280
        %v1353 = vpack.c.b16 %v1289, %v1285
        %v1354 = vpack.c.b16 %v1290, %v1286
        %v1355 = vpack.c.b16 %v1291, %v1287
        %v1356 = vpack.c.b16 %v1292, %v1288
        %1421 = vmatprep.subr.bf16.mxu0 %v1294
        %1422 = vmatpush1.bf16.msra.mxu0 %v1293
        %1423 = vmatprep.subr.bf16.mxu0 %v1298
        %1424 = vmatpush1.bf16.msra.mxu0 %v1297
        %1425 = vmatprep.subr.bf16.mxu0 %v1302
        %1426 = vmatpush1.bf16.msra.mxu0 %v1301
        %1427 = vmatprep.subr.bf16.mxu0 %v1306
        %1428 = vmatpush1.bf16.msra.mxu0 %v1305
        %1429 = vmatprep.subr.bf16.mxu0 %v1310
        %1430 = vmatpush1.bf16.msra.mxu0 %v1309
        %1431 = vmatprep.subr.bf16.mxu0 %v1314
        %1432 = vmatpush1.bf16.msra.mxu0 %v1313
        %1433 = vmatprep.subr.bf16.mxu0 %v1318
        %1434 = vmatpush1.bf16.msra.mxu0 %v1317
        %1435 = vmatprep.subr.bf16.mxu0 %v1322
        %1436 = vmatpush1.bf16.msra.mxu0 %v1321
        %1437 = vmatprep.subr.bf16.mxu0 %v1326
        %1438 = vmatpush1.bf16.msra.mxu0 %v1325
        %1439 = vmatprep.subr.bf16.mxu0 %v1330
        %1440 = vmatpush1.bf16.msra.mxu0 %v1329
        %1441 = vmatprep.subr.bf16.mxu0 %v1334
        %1442 = vmatpush1.bf16.msra.mxu0 %v1333
        %1443 = vmatprep.subr.bf16.mxu0 %v1338
        %1444 = vmatpush1.bf16.msra.mxu0 %v1337
        %1445 = vmatprep.subr.bf16.mxu0 %v1342
        %1446 = vmatpush1.bf16.msra.mxu0 %v1341
        %1447 = vmatprep.subr.bf16.mxu0 %v1346
        %1448 = vmatpush1.bf16.msra.mxu0 %v1345
        %1449 = vmatprep.subr.bf16.mxu0 %v1350
        %1450 = vmatpush1.bf16.msra.mxu0 %v1349
        %1451 = vmatprep.subr.bf16.mxu0 %v1354
        %1452 = vmatpush1.bf16.msra.mxu0 %v1353
        %1453 = vmatprep.mubr.bf16.mxu0 %v1028
        %1454 = vmatmul.mubr.bf16.gmra.mrb[0].mxu0 %v1027
        %v1455 = vpop.f32.mrb[0].mxu0
        %v1456 = vadd.f32 0.0, %v1455
        %v1457 = vpop.f32.mrb[0].mxu0
        %v1458 = vadd.f32 0.0, %v1457
        %v1459 = vpop.f32.mrb[0].mxu0
        %v1460 = vadd.f32 0.0, %v1459
        %v1461 = vpop.f32.mrb[0].mxu0
        %v1462 = vadd.f32 0.0, %v1461
        %1463 = vdwg.mxu0
        %1464 = vmatprep.subr.bf16.mxu0 %v1296
        %1465 = vmatpush1.bf16.msra.mxu0 %v1295
        %1466 = vmatprep.subr.bf16.mxu0 %v1300
        %1467 = vmatpush1.bf16.msra.mxu0 %v1299
        %1468 = vmatprep.subr.bf16.mxu0 %v1304
        %1469 = vmatpush1.bf16.msra.mxu0 %v1303
        %1470 = vmatprep.subr.bf16.mxu0 %v1308
        %1471 = vmatpush1.bf16.msra.mxu0 %v1307
        %1472 = vmatprep.subr.bf16.mxu0 %v1312
        %1473 = vmatpush1.bf16.msra.mxu0 %v1311
        %1474 = vmatprep.subr.bf16.mxu0 %v1316
        %1475 = vmatpush1.bf16.msra.mxu0 %v1315
        %1476 = vmatprep.subr.bf16.mxu0 %v1320
        %1477 = vmatpush1.bf16.msra.mxu0 %v1319
        %1478 = vmatprep.subr.bf16.mxu0 %v1324
        %1479 = vmatpush1.bf16.msra.mxu0 %v1323
        %1480 = vmatprep.subr.bf16.mxu0 %v1328
        %1481 = vmatpush1.bf16.msra.mxu0 %v1327
        %1482 = vmatprep.subr.bf16.mxu0 %v1332
        %1483 = vmatpush1.bf16.msra.mxu0 %v1331
        %1484 = vmatprep.subr.bf16.mxu0 %v1336
        %1485 = vmatpush1.bf16.msra.mxu0 %v1335
        %1486 = vmatprep.subr.bf16.mxu0 %v1340
        %1487 = vmatpush1.bf16.msra.mxu0 %v1339
        %1488 = vmatprep.subr.bf16.mxu0 %v1344
        %1489 = vmatpush1.bf16.msra.mxu0 %v1343
        %1490 = vmatprep.subr.bf16.mxu0 %v1348
        %1491 = vmatpush1.bf16.msra.mxu0 %v1347
        %1492 = vmatprep.subr.bf16.mxu0 %v1352
        %1493 = vmatpush1.bf16.msra.mxu0 %v1351
        %1494 = vmatprep.subr.bf16.mxu0 %v1356
        %1495 = vmatpush1.bf16.msra.mxu0 %v1355
        %1496 = vmatprep.mubr.bf16.mxu0 %v1028
        %1497 = vmatmul.mubr.bf16.gmra.mrb[0].mxu0 %v1027
        %v1498 = vpop.f32.mrb[0].mxu0
        %v1499 = vadd.f32 0.0, %v1498
        %v1500 = vpop.f32.mrb[0].mxu0
        %v1501 = vadd.f32 0.0, %v1500
        %v1502 = vpop.f32.mrb[0].mxu0
        %v1503 = vadd.f32 0.0, %v1502
        %v1504 = vpop.f32.mrb[0].mxu0
        %v1505 = vadd.f32 0.0, %v1504
        %1506 = vdwg.mxu0
        %v1507 = vadd.f32 %v1029, %v1456
        %v1508 = vadd.f32 %v1030, %v1458
        %v1509 = vadd.f32 %v1031, %v1499
        %v1510 = vadd.f32 %v1032, %v1501
        %v1511 = vadd.f32 %v1033, %v1460
        %v1512 = vadd.f32 %v1034, %v1462
        %v1513 = vadd.f32 %v1035, %v1503
        %v1514 = vadd.f32 %v1036, %v1505
        %1515 = vst [vmem:[#allocation2] sm:$0xff] %v1507
        %1516 = vst [vmem:[#allocation2 + $0x8] sm:$0xff] %v1508
        %1517 = vst [vmem:[#allocation2 + $0x10] sm:$0xff] %v1509
        %1518 = vst [vmem:[#allocation2 + $0x18] sm:$0xff] %v1510
        %1519 = vst [vmem:[#allocation2 + $0x20] sm:$0xff] %v1511
        %1520 = vst [vmem:[#allocation2 + $0x28] sm:$0xff] %v1512
        %1521 = vst [vmem:[#allocation2 + $0x30] sm:$0xff] %v1513
        %1522 = vst [vmem:[#allocation2 + $0x38] sm:$0xff] %v1514
        %p1523 = scmp.eq.s32.totalorder %s31, 1
        // Predicated region
        $region81: #{tpu_custom_call.1} parent=55 // pred_check
          %p1524 = pneg %p1523
        $region82: #{tpu_custom_call.1} parent=55 // pred_check_branch
          %1526 = sbr.rel (%p1524) target = $region84
        $region83: #{tpu_custom_call.1} parent=55 // pred_region
          %v1527 = vld [vmem:[#allocation2] sm:$0xff]
          %v1528 = vld [vmem:[#allocation2 + $0x8] sm:$0xff]
          %v1529 = vld [vmem:[#allocation2 + $0x10] sm:$0xff]
          %v1530 = vld [vmem:[#allocation2 + $0x18] sm:$0xff]
          %v1531 = vld [vmem:[#allocation2 + $0x20] sm:$0xff]
          %v1532 = vld [vmem:[#allocation2 + $0x28] sm:$0xff]
          %v1533 = vld [vmem:[#allocation2 + $0x30] sm:$0xff]
          %v1534 = vld [vmem:[#allocation2 + $0x38] sm:$0xff]
          %v1535 = vld [vmem:[%s4] sm:$0xf]
          %v1537 = vlaneseq
          %v1538 = vshrl.u32 %v1537, 7
          %v1539 = vsub.s32 0, %v1538
          %v1540 = vrot.slane %v1535, %v1539
          %v1541 = vlaneseq
          %v1542 = vshrl.u32 %v1541, 7
          %v1543 = vsub.s32 1, %v1542
          %v1544 = vrot.slane %v1535, %v1543
          %v1545 = vlaneseq
          %v1546 = vshrl.u32 %v1545, 7
          %v1547 = vsub.s32 2, %v1546
          %v1548 = vrot.slane %v1535, %v1547
          %v1549 = vlaneseq
          %v1550 = vshrl.u32 %v1549, 7
          %v1551 = vsub.s32 3, %v1550
          %v1552 = vrot.slane %v1535, %v1551
          %v1557 = vadd.f32 %v1527, %v1540
          %v1558 = vadd.f32 %v1528, %v1544
          %v1559 = vadd.f32 %v1529, %v1548
          %v1560 = vadd.f32 %v1530, %v1552
          %v1561 = vadd.f32 %v1531, %v1540
          %v1562 = vadd.f32 %v1532, %v1544
          %v1563 = vadd.f32 %v1533, %v1548
          %v1564 = vadd.f32 %v1534, %v1552
          %v1565 = vmax.f32 %v1557, 0.0
          %v1566 = vmax.f32 %v1558, 0.0
          %v1567 = vmax.f32 %v1559, 0.0
          %v1568 = vmax.f32 %v1560, 0.0
          %v1569 = vmax.f32 %v1561, 0.0
          %v1570 = vmax.f32 %v1562, 0.0
          %v1571 = vmax.f32 %v1563, 0.0
          %v1572 = vmax.f32 %v1564, 0.0
          %v1573 = vpack.c.bf16 %v1569, %v1565
          %v1574 = vpack.c.bf16 %v1570, %v1566
          %v1575 = vpack.c.bf16 %v1571, %v1567
          %v1576 = vpack.c.bf16 %v1572, %v1568
          %v1577 = vld [vmem:[#allocation9] sm:$0xff]
          %v1578 = vld [vmem:[#allocation9 + $0x8] sm:$0xff]
          %v1579 = vld [vmem:[#allocation9 + $0x10] sm:$0xff]
          %v1580 = vld [vmem:[#allocation9 + $0x18] sm:$0xff]
          %v1581 = vld [vmem:[#allocation9 + $0x20] sm:$0xff]
          %v1582 = vld [vmem:[#allocation9 + $0x28] sm:$0xff]
          %v1583 = vld [vmem:[#allocation9 + $0x30] sm:$0xff]
          %v1584 = vld [vmem:[#allocation9 + $0x38] sm:$0xff]
          %v1585 = vld [vmem:[#allocation9 + $0x40] sm:$0xff]
          %v1586 = vld [vmem:[#allocation9 + $0x48] sm:$0xff]
          %v1587 = vld [vmem:[#allocation9 + $0x50] sm:$0xff]
          %v1588 = vld [vmem:[#allocation9 + $0x58] sm:$0xff]
          %v1589 = vld [vmem:[#allocation9 + $0x60] sm:$0xff]
          %v1590 = vld [vmem:[#allocation9 + $0x68] sm:$0xff]
          %v1591 = vld [vmem:[#allocation9 + $0x70] sm:$0xff]
          %v1592 = vld [vmem:[#allocation9 + $0x78] sm:$0xff]
          %v1593 = vld [vmem:[#allocation9 + $0x80] sm:$0xff]
          %v1594 = vld [vmem:[#allocation9 + $0x88] sm:$0xff]
          %v1595 = vld [vmem:[#allocation9 + $0x90] sm:$0xff]
          %v1596 = vld [vmem:[#allocation9 + $0x98] sm:$0xff]
          %v1597 = vld [vmem:[#allocation9 + $0xa0] sm:$0xff]
          %v1598 = vld [vmem:[#allocation9 + $0xa8] sm:$0xff]
          %v1599 = vld [vmem:[#allocation9 + $0xb0] sm:$0xff]
          %v1600 = vld [vmem:[#allocation9 + $0xb8] sm:$0xff]
          %v1601 = vld [vmem:[#allocation9 + $0xc0] sm:$0xff]
          %v1602 = vld [vmem:[#allocation9 + $0xc8] sm:$0xff]
          %v1603 = vld [vmem:[#allocation9 + $0xd0] sm:$0xff]
          %v1604 = vld [vmem:[#allocation9 + $0xd8] sm:$0xff]
          %v1605 = vld [vmem:[#allocation9 + $0xe0] sm:$0xff]
          %v1606 = vld [vmem:[#allocation9 + $0xe8] sm:$0xff]
          %v1607 = vld [vmem:[#allocation9 + $0xf0] sm:$0xff]
          %v1608 = vld [vmem:[#allocation9 + $0xf8] sm:$0xff]
          %v1609 = vld [vmem:[#allocation9 + $0x100] sm:$0xff]
          %v1610 = vld [vmem:[#allocation9 + $0x108] sm:$0xff]
          %v1611 = vld [vmem:[#allocation9 + $0x110] sm:$0xff]
          %v1612 = vld [vmem:[#allocation9 + $0x118] sm:$0xff]
          %v1613 = vld [vmem:[#allocation9 + $0x120] sm:$0xff]
          %v1614 = vld [vmem:[#allocation9 + $0x128] sm:$0xff]
          %v1615 = vld [vmem:[#allocation9 + $0x130] sm:$0xff]
          %v1616 = vld [vmem:[#allocation9 + $0x138] sm:$0xff]
          %v1617 = vld [vmem:[#allocation9 + $0x140] sm:$0xff]
          %v1618 = vld [vmem:[#allocation9 + $0x148] sm:$0xff]
          %v1619 = vld [vmem:[#allocation9 + $0x150] sm:$0xff]
          %v1620 = vld [vmem:[#allocation9 + $0x158] sm:$0xff]
          %v1621 = vld [vmem:[#allocation9 + $0x160] sm:$0xff]
          %v1622 = vld [vmem:[#allocation9 + $0x168] sm:$0xff]
          %v1623 = vld [vmem:[#allocation9 + $0x170] sm:$0xff]
          %v1624 = vld [vmem:[#allocation9 + $0x178] sm:$0xff]
          %v1625 = vld [vmem:[#allocation9 + $0x180] sm:$0xff]
          %v1626 = vld [vmem:[#allocation9 + $0x188] sm:$0xff]
          %v1627 = vld [vmem:[#allocation9 + $0x190] sm:$0xff]
          %v1628 = vld [vmem:[#allocation9 + $0x198] sm:$0xff]
          %v1629 = vld [vmem:[#allocation9 + $0x1a0] sm:$0xff]
          %v1630 = vld [vmem:[#allocation9 + $0x1a8] sm:$0xff]
          %v1631 = vld [vmem:[#allocation9 + $0x1b0] sm:$0xff]
          %v1632 = vld [vmem:[#allocation9 + $0x1b8] sm:$0xff]
          %v1633 = vld [vmem:[#allocation9 + $0x1c0] sm:$0xff]
          %v1634 = vld [vmem:[#allocation9 + $0x1c8] sm:$0xff]
          %v1635 = vld [vmem:[#allocation9 + $0x1d0] sm:$0xff]
          %v1636 = vld [vmem:[#allocation9 + $0x1d8] sm:$0xff]
          %v1637 = vld [vmem:[#allocation9 + $0x1e0] sm:$0xff]
          %v1638 = vld [vmem:[#allocation9 + $0x1e8] sm:$0xff]
          %v1639 = vld [vmem:[#allocation9 + $0x1f0] sm:$0xff]
          %v1640 = vld [vmem:[#allocation9 + $0x1f8] sm:$0xff]
          %v1641 = vld [vmem:[%s6] sm:$0x3]
          %v1643 = vlaneseq
          %v1644 = vshrl.u32 %v1643, 7
          %v1645 = vsub.s32 0, %v1644
          %v1646 = vrot.slane %v1641, %v1645
          %v1647 = vlaneseq
          %v1648 = vshrl.u32 %v1647, 7
          %v1649 = vsub.s32 1, %v1648
          %v1650 = vrot.slane %v1641, %v1649
          %v1717 = vunpack.c.l.b16 %v1577
          %v1718 = vunpack.c.h.b16 %v1577
          %v1719 = vunpack.c.l.b16 %v1578
          %v1720 = vunpack.c.h.b16 %v1578
          %v1721 = vunpack.c.l.b16 %v1579
          %v1722 = vunpack.c.h.b16 %v1579
          %v1723 = vunpack.c.l.b16 %v1580
          %v1724 = vunpack.c.h.b16 %v1580
          %v1725 = vunpack.c.l.b16 %v1581
          %v1726 = vunpack.c.h.b16 %v1581
          %v1727 = vunpack.c.l.b16 %v1582
          %v1728 = vunpack.c.h.b16 %v1582
          %v1729 = vunpack.c.l.b16 %v1583
          %v1730 = vunpack.c.h.b16 %v1583
          %v1731 = vunpack.c.l.b16 %v1584
          %v1732 = vunpack.c.h.b16 %v1584
          %v1733 = vunpack.c.l.b16 %v1585
          %v1734 = vunpack.c.h.b16 %v1585
          %v1735 = vunpack.c.l.b16 %v1586
          %v1736 = vunpack.c.h.b16 %v1586
          %v1737 = vunpack.c.l.b16 %v1587
          %v1738 = vunpack.c.h.b16 %v1587
          %v1739 = vunpack.c.l.b16 %v1588
          %v1740 = vunpack.c.h.b16 %v1588
          %v1741 = vunpack.c.l.b16 %v1589
          %v1742 = vunpack.c.h.b16 %v1589
          %v1743 = vunpack.c.l.b16 %v1590
          %v1744 = vunpack.c.h.b16 %v1590
          %v1745 = vunpack.c.l.b16 %v1591
          %v1746 = vunpack.c.h.b16 %v1591
          %v1747 = vunpack.c.l.b16 %v1592
          %v1748 = vunpack.c.h.b16 %v1592
          %v1749 = vunpack.c.l.b16 %v1593
          %v1750 = vunpack.c.h.b16 %v1593
          %v1751 = vunpack.c.l.b16 %v1594
          %v1752 = vunpack.c.h.b16 %v1594
          %v1753 = vunpack.c.l.b16 %v1595
          %v1754 = vunpack.c.h.b16 %v1595
          %v1755 = vunpack.c.l.b16 %v1596
          %v1756 = vunpack.c.h.b16 %v1596
          %v1757 = vunpack.c.l.b16 %v1597
          %v1758 = vunpack.c.h.b16 %v1597
          %v1759 = vunpack.c.l.b16 %v1598
          %v1760 = vunpack.c.h.b16 %v1598
          %v1761 = vunpack.c.l.b16 %v1599
          %v1762 = vunpack.c.h.b16 %v1599
          %v1763 = vunpack.c.l.b16 %v1600
          %v1764 = vunpack.c.h.b16 %v1600
          %v1765 = vunpack.c.l.b16 %v1601
          %v1766 = vunpack.c.h.b16 %v1601
          %v1767 = vunpack.c.l.b16 %v1602
          %v1768 = vunpack.c.h.b16 %v1602
          %v1769 = vunpack.c.l.b16 %v1603
          %v1770 = vunpack.c.h.b16 %v1603
          %v1771 = vunpack.c.l.b16 %v1604
          %v1772 = vunpack.c.h.b16 %v1604
          %v1773 = vunpack.c.l.b16 %v1605
          %v1774 = vunpack.c.h.b16 %v1605
          %v1775 = vunpack.c.l.b16 %v1606
          %v1776 = vunpack.c.h.b16 %v1606
          %v1777 = vunpack.c.l.b16 %v1607
          %v1778 = vunpack.c.h.b16 %v1607
          %v1779 = vunpack.c.l.b16 %v1608
          %v1780 = vunpack.c.h.b16 %v1608
          %v1781 = vunpack.c.l.b16 %v1609
          %v1782 = vunpack.c.h.b16 %v1609
          %v1783 = vunpack.c.l.b16 %v1610
          %v1784 = vunpack.c.h.b16 %v1610
          %v1785 = vunpack.c.l.b16 %v1611
          %v1786 = vunpack.c.h.b16 %v1611
          %v1787 = vunpack.c.l.b16 %v1612
          %v1788 = vunpack.c.h.b16 %v1612
          %v1789 = vunpack.c.l.b16 %v1613
          %v1790 = vunpack.c.h.b16 %v1613
          %v1791 = vunpack.c.l.b16 %v1614
          %v1792 = vunpack.c.h.b16 %v1614
          %v1793 = vunpack.c.l.b16 %v1615
          %v1794 = vunpack.c.h.b16 %v1615
          %v1795 = vunpack.c.l.b16 %v1616
          %v1796 = vunpack.c.h.b16 %v1616
          %v1797 = vunpack.c.l.b16 %v1617
          %v1798 = vunpack.c.h.b16 %v1617
          %v1799 = vunpack.c.l.b16 %v1618
          %v1800 = vunpack.c.h.b16 %v1618
          %v1801 = vunpack.c.l.b16 %v1619
          %v1802 = vunpack.c.h.b16 %v1619
          %v1803 = vunpack.c.l.b16 %v1620
          %v1804 = vunpack.c.h.b16 %v1620
          %v1805 = vunpack.c.l.b16 %v1621
          %v1806 = vunpack.c.h.b16 %v1621
          %v1807 = vunpack.c.l.b16 %v1622
          %v1808 = vunpack.c.h.b16 %v1622
          %v1809 = vunpack.c.l.b16 %v1623
          %v1810 = vunpack.c.h.b16 %v1623
          %v1811 = vunpack.c.l.b16 %v1624
          %v1812 = vunpack.c.h.b16 %v1624
          %v1813 = vunpack.c.l.b16 %v1625
          %v1814 = vunpack.c.h.b16 %v1625
          %v1815 = vunpack.c.l.b16 %v1626
          %v1816 = vunpack.c.h.b16 %v1626
          %v1817 = vunpack.c.l.b16 %v1627
          %v1818 = vunpack.c.h.b16 %v1627
          %v1819 = vunpack.c.l.b16 %v1628
          %v1820 = vunpack.c.h.b16 %v1628
          %v1821 = vunpack.c.l.b16 %v1629
          %v1822 = vunpack.c.h.b16 %v1629
          %v1823 = vunpack.c.l.b16 %v1630
          %v1824 = vunpack.c.h.b16 %v1630
          %v1825 = vunpack.c.l.b16 %v1631
          %v1826 = vunpack.c.h.b16 %v1631
          %v1827 = vunpack.c.l.b16 %v1632
          %v1828 = vunpack.c.h.b16 %v1632
          %v1829 = vunpack.c.l.b16 %v1633
          %v1830 = vunpack.c.h.b16 %v1633
          %v1831 = vunpack.c.l.b16 %v1634
          %v1832 = vunpack.c.h.b16 %v1634
          %v1833 = vunpack.c.l.b16 %v1635
          %v1834 = vunpack.c.h.b16 %v1635
          %v1835 = vunpack.c.l.b16 %v1636
          %v1836 = vunpack.c.h.b16 %v1636
          %v1837 = vunpack.c.l.b16 %v1637
          %v1838 = vunpack.c.h.b16 %v1637
          %v1839 = vunpack.c.l.b16 %v1638
          %v1840 = vunpack.c.h.b16 %v1638
          %v1841 = vunpack.c.l.b16 %v1639
          %v1842 = vunpack.c.h.b16 %v1639
          %v1843 = vunpack.c.l.b16 %v1640
          %v1844 = vunpack.c.h.b16 %v1640
          %v1845 = vpack.c.b16 %v1719, %v1717
          %v1846 = vpack.c.b16 %v1720, %v1718
          %v1847 = vpack.c.b16 %v1723, %v1721
          %v1848 = vpack.c.b16 %v1724, %v1722
          %v1849 = vpack.c.b16 %v1727, %v1725
          %v1850 = vpack.c.b16 %v1728, %v1726
          %v1851 = vpack.c.b16 %v1731, %v1729
          %v1852 = vpack.c.b16 %v1732, %v1730
          %v1853 = vpack.c.b16 %v1735, %v1733
          %v1854 = vpack.c.b16 %v1736, %v1734
          %v1855 = vpack.c.b16 %v1739, %v1737
          %v1856 = vpack.c.b16 %v1740, %v1738
          %v1857 = vpack.c.b16 %v1743, %v1741
          %v1858 = vpack.c.b16 %v1744, %v1742
          %v1859 = vpack.c.b16 %v1747, %v1745
          %v1860 = vpack.c.b16 %v1748, %v1746
          %v1861 = vpack.c.b16 %v1751, %v1749
          %v1862 = vpack.c.b16 %v1752, %v1750
          %v1863 = vpack.c.b16 %v1755, %v1753
          %v1864 = vpack.c.b16 %v1756, %v1754
          %v1865 = vpack.c.b16 %v1759, %v1757
          %v1866 = vpack.c.b16 %v1760, %v1758
          %v1867 = vpack.c.b16 %v1763, %v1761
          %v1868 = vpack.c.b16 %v1764, %v1762
          %v1869 = vpack.c.b16 %v1767, %v1765
          %v1870 = vpack.c.b16 %v1768, %v1766
          %v1871 = vpack.c.b16 %v1771, %v1769
          %v1872 = vpack.c.b16 %v1772, %v1770
          %v1873 = vpack.c.b16 %v1775, %v1773
          %v1874 = vpack.c.b16 %v1776, %v1774
          %v1875 = vpack.c.b16 %v1779, %v1777
          %v1876 = vpack.c.b16 %v1780, %v1778
          %v1877 = vpack.c.b16 %v1783, %v1781
          %v1878 = vpack.c.b16 %v1784, %v1782
          %v1879 = vpack.c.b16 %v1787, %v1785
          %v1880 = vpack.c.b16 %v1788, %v1786
          %v1881 = vpack.c.b16 %v1791, %v1789
          %v1882 = vpack.c.b16 %v1792, %v1790
          %v1883 = vpack.c.b16 %v1795, %v1793
          %v1884 = vpack.c.b16 %v1796, %v1794
          %v1885 = vpack.c.b16 %v1799, %v1797
          %v1886 = vpack.c.b16 %v1800, %v1798
          %v1887 = vpack.c.b16 %v1803, %v1801
          %v1888 = vpack.c.b16 %v1804, %v1802
          %v1889 = vpack.c.b16 %v1807, %v1805
          %v1890 = vpack.c.b16 %v1808, %v1806
          %v1891 = vpack.c.b16 %v1811, %v1809
          %v1892 = vpack.c.b16 %v1812, %v1810
          %v1893 = vpack.c.b16 %v1815, %v1813
          %v1894 = vpack.c.b16 %v1816, %v1814
          %v1895 = vpack.c.b16 %v1819, %v1817
          %v1896 = vpack.c.b16 %v1820, %v1818
          %v1897 = vpack.c.b16 %v1823, %v1821
          %v1898 = vpack.c.b16 %v1824, %v1822
          %v1899 = vpack.c.b16 %v1827, %v1825
          %v1900 = vpack.c.b16 %v1828, %v1826
          %v1901 = vpack.c.b16 %v1831, %v1829
          %v1902 = vpack.c.b16 %v1832, %v1830
          %v1903 = vpack.c.b16 %v1835, %v1833
          %v1904 = vpack.c.b16 %v1836, %v1834
          %v1905 = vpack.c.b16 %v1839, %v1837
          %v1906 = vpack.c.b16 %v1840, %v1838
          %v1907 = vpack.c.b16 %v1843, %v1841
          %v1908 = vpack.c.b16 %v1844, %v1842
          %1973 = vmatprep.subr.bf16.mxu0 %v1846
          %1974 = vmatpush1.bf16.msra.mxu0 %v1845
          %1975 = vmatprep.subr.bf16.mxu0 %v1848
          %1976 = vmatpush1.bf16.msra.mxu0 %v1847
          %1977 = vmatprep.subr.bf16.mxu0 %v1850
          %1978 = vmatpush1.bf16.msra.mxu0 %v1849
          %1979 = vmatprep.subr.bf16.mxu0 %v1852
          %1980 = vmatpush1.bf16.msra.mxu0 %v1851
          %1981 = vmatprep.subr.bf16.mxu0 %v1854
          %1982 = vmatpush1.bf16.msra.mxu0 %v1853
          %1983 = vmatprep.subr.bf16.mxu0 %v1856
          %1984 = vmatpush1.bf16.msra.mxu0 %v1855
          %1985 = vmatprep.subr.bf16.mxu0 %v1858
          %1986 = vmatpush1.bf16.msra.mxu0 %v1857
          %1987 = vmatprep.subr.bf16.mxu0 %v1860
          %1988 = vmatpush1.bf16.msra.mxu0 %v1859
          %1989 = vmatprep.subr.bf16.mxu0 %v1862
          %1990 = vmatpush1.bf16.msra.mxu0 %v1861
          %1991 = vmatprep.subr.bf16.mxu0 %v1864
          %1992 = vmatpush1.bf16.msra.mxu0 %v1863
          %1993 = vmatprep.subr.bf16.mxu0 %v1866
          %1994 = vmatpush1.bf16.msra.mxu0 %v1865
          %1995 = vmatprep.subr.bf16.mxu0 %v1868
          %1996 = vmatpush1.bf16.msra.mxu0 %v1867
          %1997 = vmatprep.subr.bf16.mxu0 %v1870
          %1998 = vmatpush1.bf16.msra.mxu0 %v1869
          %1999 = vmatprep.subr.bf16.mxu0 %v1872
          %2000 = vmatpush1.bf16.msra.mxu0 %v1871
          %2001 = vmatprep.subr.bf16.mxu0 %v1874
          %2002 = vmatpush1.bf16.msra.mxu0 %v1873
          %2003 = vmatprep.subr.bf16.mxu0 %v1876
          %2004 = vmatpush1.bf16.msra.mxu0 %v1875
          %2005 = vmatprep.mubr.bf16.mxu0 %v1574
          %2006 = vmatmul.mubr.bf16.gmra.mrb[0].mxu0 %v1573
          %v2007 = vpop.f32.mrb[0].mxu0
          %v2008 = vadd.f32 %v1646, %v2007
          %v2009 = vpop.f32.mrb[0].mxu0
          %v2010 = vadd.f32 %v1650, %v2009
          %v2011 = vpop.f32.mrb[0].mxu0
          %v2012 = vadd.f32 %v1646, %v2011
          %v2013 = vpop.f32.mrb[0].mxu0
          %v2014 = vadd.f32 %v1650, %v2013
          %2015 = vdwg.mxu0
          %2016 = vmatprep.subr.bf16.mxu0 %v1878
          %2017 = vmatpush1.bf16.msra.mxu0 %v1877
          %2018 = vmatprep.subr.bf16.mxu0 %v1880
          %2019 = vmatpush1.bf16.msra.mxu0 %v1879
          %2020 = vmatprep.subr.bf16.mxu0 %v1882
          %2021 = vmatpush1.bf16.msra.mxu0 %v1881
          %2022 = vmatprep.subr.bf16.mxu0 %v1884
          %2023 = vmatpush1.bf16.msra.mxu0 %v1883
          %2024 = vmatprep.subr.bf16.mxu0 %v1886
          %2025 = vmatpush1.bf16.msra.mxu0 %v1885
          %2026 = vmatprep.subr.bf16.mxu0 %v1888
          %2027 = vmatpush1.bf16.msra.mxu0 %v1887
          %2028 = vmatprep.subr.bf16.mxu0 %v1890
          %2029 = vmatpush1.bf16.msra.mxu0 %v1889
          %2030 = vmatprep.subr.bf16.mxu0 %v1892
          %2031 = vmatpush1.bf16.msra.mxu0 %v1891
          %2032 = vmatprep.subr.bf16.mxu0 %v1894
          %2033 = vmatpush1.bf16.msra.mxu0 %v1893
          %2034 = vmatprep.subr.bf16.mxu0 %v1896
          %2035 = vmatpush1.bf16.msra.mxu0 %v1895
          %2036 = vmatprep.subr.bf16.mxu0 %v1898
          %2037 = vmatpush1.bf16.msra.mxu0 %v1897
          %2038 = vmatprep.subr.bf16.mxu0 %v1900
          %2039 = vmatpush1.bf16.msra.mxu0 %v1899
          %2040 = vmatprep.subr.bf16.mxu0 %v1902
          %2041 = vmatpush1.bf16.msra.mxu0 %v1901
          %2042 = vmatprep.subr.bf16.mxu0 %v1904
          %2043 = vmatpush1.bf16.msra.mxu0 %v1903
          %2044 = vmatprep.subr.bf16.mxu0 %v1906
          %2045 = vmatpush1.bf16.msra.mxu0 %v1905
          %2046 = vmatprep.subr.bf16.mxu0 %v1908
          %2047 = vmatpush1.bf16.msra.mxu0 %v1907
          %2048 = vmatprep.mubr.bf16.mxu0 %v1576
          %2049 = vmatmul.mubr.bf16.gmra.mrb[0].mxu0 %v1575
          %v2050 = vpop.f32.mrb[0].mxu0
          %v2051 = vadd.f32 %v2008, %v2050
          %v2052 = vpop.f32.mrb[0].mxu0
          %v2053 = vadd.f32 %v2010, %v2052
          %v2054 = vpop.f32.mrb[0].mxu0
          %v2055 = vadd.f32 %v2012, %v2054
          %v2056 = vpop.f32.mrb[0].mxu0
          %v2057 = vadd.f32 %v2014, %v2056
          %2058 = vdwg.mxu0
          %v2059 = vmax.f32 %v2051, 0.0
          %v2060 = vmax.f32 %v2053, 0.0
          %v2061 = vmax.f32 %v2055, 0.0
          %v2062 = vmax.f32 %v2057, 0.0
          %v2063 = vpack.c.bf16 %v2061, %v2059
          %v2064 = vpack.c.bf16 %v2062, %v2060
          %v2065 = vld [vmem:[#allocation11] sm:$0xf]
          %v2066 = vld [vmem:[#allocation11 + $0x4] sm:$0xf]
          %v2067 = vld [vmem:[#allocation11 + $0x8] sm:$0xf]
          %v2068 = vld [vmem:[#allocation11 + $0xc] sm:$0xf]
          %v2069 = vld [vmem:[#allocation11 + $0x10] sm:$0xf]
          %v2070 = vld [vmem:[#allocation11 + $0x14] sm:$0xf]
          %v2071 = vld [vmem:[#allocation11 + $0x18] sm:$0xf]
          %v2072 = vld [vmem:[#allocation11 + $0x1c] sm:$0xf]
          %v2073 = vld [vmem:[#allocation11 + $0x20] sm:$0xf]
          %v2074 = vld [vmem:[#allocation11 + $0x24] sm:$0xf]
          %v2075 = vld [vmem:[#allocation11 + $0x28] sm:$0xf]
          %v2076 = vld [vmem:[#allocation11 + $0x2c] sm:$0xf]
          %v2077 = vld [vmem:[#allocation11 + $0x30] sm:$0xf]
          %v2078 = vld [vmem:[#allocation11 + $0x34] sm:$0xf]
          %v2079 = vld [vmem:[#allocation11 + $0x38] sm:$0xf]
          %v2080 = vld [vmem:[#allocation11 + $0x3c] sm:$0xf]
          %v2081 = vld [vmem:[#allocation11 + $0x40] sm:$0xf]
          %v2082 = vld [vmem:[#allocation11 + $0x44] sm:$0xf]
          %v2083 = vld [vmem:[#allocation11 + $0x48] sm:$0xf]
          %v2084 = vld [vmem:[#allocation11 + $0x4c] sm:$0xf]
          %v2085 = vld [vmem:[#allocation11 + $0x50] sm:$0xf]
          %v2086 = vld [vmem:[#allocation11 + $0x54] sm:$0xf]
          %v2087 = vld [vmem:[#allocation11 + $0x58] sm:$0xf]
          %v2088 = vld [vmem:[#allocation11 + $0x5c] sm:$0xf]
          %v2089 = vld [vmem:[#allocation11 + $0x60] sm:$0xf]
          %v2090 = vld [vmem:[#allocation11 + $0x64] sm:$0xf]
          %v2091 = vld [vmem:[#allocation11 + $0x68] sm:$0xf]
          %v2092 = vld [vmem:[#allocation11 + $0x6c] sm:$0xf]
          %v2093 = vld [vmem:[#allocation11 + $0x70] sm:$0xf]
          %v2094 = vld [vmem:[#allocation11 + $0x74] sm:$0xf]
          %v2095 = vld [vmem:[#allocation11 + $0x78] sm:$0xf]
          %v2096 = vld [vmem:[#allocation11 + $0x7c] sm:$0xf]
          %v2097 = vld [vmem:[%s8] sm:$0x1]
          %v2099 = vlaneseq
          %v2100 = vshrl.u32 %v2099, 7
          %v2101 = vsub.s32 0, %v2100
          %v2102 = vrot.slane %v2097, %v2101
          %v2136 = vunpack.c.l.b16 %v2065
          %v2137 = vunpack.c.l.b16 %v2066
          %v2138 = vunpack.c.l.b16 %v2067
          %v2139 = vunpack.c.l.b16 %v2068
          %v2140 = vunpack.c.l.b16 %v2069
          %v2141 = vunpack.c.l.b16 %v2070
          %v2142 = vunpack.c.l.b16 %v2071
          %v2143 = vunpack.c.l.b16 %v2072
          %v2144 = vunpack.c.l.b16 %v2073
          %v2145 = vunpack.c.l.b16 %v2074
          %v2146 = vunpack.c.l.b16 %v2075
          %v2147 = vunpack.c.l.b16 %v2076
          %v2148 = vunpack.c.l.b16 %v2077
          %v2149 = vunpack.c.l.b16 %v2078
          %v2150 = vunpack.c.l.b16 %v2079
          %v2151 = vunpack.c.l.b16 %v2080
          %v2152 = vunpack.c.l.b16 %v2081
          %v2153 = vunpack.c.l.b16 %v2082
          %v2154 = vunpack.c.l.b16 %v2083
          %v2155 = vunpack.c.l.b16 %v2084
          %v2156 = vunpack.c.l.b16 %v2085
          %v2157 = vunpack.c.l.b16 %v2086
          %v2158 = vunpack.c.l.b16 %v2087
          %v2159 = vunpack.c.l.b16 %v2088
          %v2160 = vunpack.c.l.b16 %v2089
          %v2161 = vunpack.c.l.b16 %v2090
          %v2162 = vunpack.c.l.b16 %v2091
          %v2163 = vunpack.c.l.b16 %v2092
          %v2164 = vunpack.c.l.b16 %v2093
          %v2165 = vunpack.c.l.b16 %v2094
          %v2166 = vunpack.c.l.b16 %v2095
          %v2167 = vunpack.c.l.b16 %v2096
          %v2168 = vpack.c.b16 %v2137, %v2136
          %v2169 = vpack.c.b16 %v2139, %v2138
          %v2170 = vpack.c.b16 %v2141, %v2140
          %v2171 = vpack.c.b16 %v2143, %v2142
          %v2172 = vpack.c.b16 %v2145, %v2144
          %v2173 = vpack.c.b16 %v2147, %v2146
          %v2174 = vpack.c.b16 %v2149, %v2148
          %v2175 = vpack.c.b16 %v2151, %v2150
          %v2176 = vpack.c.b16 %v2153, %v2152
          %v2177 = vpack.c.b16 %v2155, %v2154
          %v2178 = vpack.c.b16 %v2157, %v2156
          %v2179 = vpack.c.b16 %v2159, %v2158
          %v2180 = vpack.c.b16 %v2161, %v2160
          %v2181 = vpack.c.b16 %v2163, %v2162
          %v2182 = vpack.c.b16 %v2165, %v2164
          %v2183 = vpack.c.b16 %v2167, %v2166
          %2200 = vmatprep.subr.bf16.mxu0 0
          %2201 = vmatpush1.bf16.msra.mxu0 %v2168
          %2202 = vmatprep.subr.bf16.mxu0 0
          %2203 = vmatpush1.bf16.msra.mxu0 %v2169
          %2204 = vmatprep.subr.bf16.mxu0 0
          %2205 = vmatpush1.bf16.msra.mxu0 %v2170
          %2206 = vmatprep.subr.bf16.mxu0 0
          %2207 = vmatpush1.bf16.msra.mxu0 %v2171
          %2208 = vmatprep.subr.bf16.mxu0 0
          %2209 = vmatpush1.bf16.msra.mxu0 %v2172
          %2210 = vmatprep.subr.bf16.mxu0 0
          %2211 = vmatpush1.bf16.msra.mxu0 %v2173
          %2212 = vmatprep.subr.bf16.mxu0 0
          %2213 = vmatpush1.bf16.msra.mxu0 %v2174
          %2214 = vmatprep.subr.bf16.mxu0 0
          %2215 = vmatpush1.bf16.msra.mxu0 %v2175
          %2216 = vmatprep.subr.bf16.mxu0 0
          %2217 = vmatpush1.bf16.msra.mxu0 %v2176
          %2218 = vmatprep.subr.bf16.mxu0 0
          %2219 = vmatpush1.bf16.msra.mxu0 %v2177
          %2220 = vmatprep.subr.bf16.mxu0 0
          %2221 = vmatpush1.bf16.msra.mxu0 %v2178
          %2222 = vmatprep.subr.bf16.mxu0 0
          %2223 = vmatpush1.bf16.msra.mxu0 %v2179
          %2224 = vmatprep.subr.bf16.mxu0 0
          %2225 = vmatpush1.bf16.msra.mxu0 %v2180
          %2226 = vmatprep.subr.bf16.mxu0 0
          %2227 = vmatpush1.bf16.msra.mxu0 %v2181
          %2228 = vmatprep.subr.bf16.mxu0 0
          %2229 = vmatpush1.bf16.msra.mxu0 %v2182
          %2230 = vmatprep.subr.bf16.mxu0 0
          %2231 = vmatpush1.bf16.msra.mxu0 %v2183
          %2232 = vmatprep.mubr.bf16.mxu0 %v2064
          %2233 = vmatmul.mubr.bf16.gmra.mrb[0].mxu0 %v2063
          %v2234 = vpop.f32.mrb[0].mxu0
          %v2235 = vadd.f32 %v2102, %v2234
          %v2236 = vpop.f32.mrb[0].mxu0
          %v2237 = vpop.f32.mrb[0].mxu0
          %v2238 = vadd.f32 %v2102, %v2237
          %v2239 = vpop.f32.mrb[0].mxu0
          %2240 = vdwg.mxu0
          %2241 = vst [vmem:[#allocation12] sm:$0xff] %v2235
          %2242 = vst [vmem:[#allocation12 + $0x8] sm:$0xff] %v2238
        $region84: #{tpu_custom_call.1} parent=55 // pred_fallthru
          _
        // Predicated region
        $region85: #{tpu_custom_call.1} parent=55 // pred_check
          %p2243 = pneg %p265
        $region86: #{tpu_custom_call.1} parent=55 // pred_check_branch
          %2245 = sbr.rel (%p2243) target = $region88
        $region87: #{tpu_custom_call.1} parent=55 // pred_region
          %s2246 = smul.u32 2, %s30
          %s2248 = ssub.s32 256, 256
          %2249 = vsyncadd [#allocation5], %s2248
          %s2250 = smul.addr %s2246, 128
          %s2251 = scalar_lea.hbm %s9, %s2250
          %s2252 = sshll.u32 [#allocation12], 4
          %s2253 = int_to_ptr.vmem [resolvable:$true] %s2252
          %2258 = dma.vmem_to_hbm [thread:$0]  %s2253, 256, %s2251, [#allocation5], 128, 128, 8
        $region88: #{tpu_custom_call.1} parent=55 // pred_fallthru
          _
        // Predicated region
        $region89: #{tpu_custom_call.1} parent=55 // pred_check
          %p2259 = pneg %p265
        $region90: #{tpu_custom_call.1} parent=55 // pred_check_branch
          %2261 = sbr.rel (%p2259) target = $region92
        $region91: #{tpu_custom_call.1} parent=55 // pred_region
          %2262 = dma.done [#allocation5], 256
        $region92: #{tpu_custom_call.1} parent=55 // pred_fallthru
          _
      $region56: #{tpu_custom_call.1} parent=5 // pred_fallthru
        _
      %p2263 = scmp.le.s32.totalorder 2, %s21
      // Predicated region
      $region93: #{tpu_custom_call.1} parent=5 // pred_check
        %p2264 = pneg %p2263
      $region94: #{tpu_custom_call.1} parent=5 // pred_check_branch
        %2266 = sbr.rel (%p2264) target = $region96
      $region95: #{tpu_custom_call.1} parent=5 // pred_region
        %s2267 = ssub.s32 %s21, 2
      $region96: #{tpu_custom_call.1} parent=5 // pred_fallthru
        _
    $region6: #{tpu_custom_call.1} parent=1 // loop_footer
      %s25 = sadd.s32 1, %s21
    $region7: #{tpu_custom_call.1} parent=1 // loop_footer_branch
      %20 = sbr.rel target = $region3
    $region8: #{tpu_custom_call.1} parent=1 // loop_exit
      _
    %2268 = vsyncpa [#allocation4], 1
    %s2269 = scalar_lea.sflag [#allocation4], 1
    %2270 = vsyncpa %s2269, 1
    %2271 = vsyncpa [#allocation7], 1
    %s2272 = scalar_lea.sflag [#allocation7], 1
    %2273 = vsyncpa %s2272, 1
    %2274 = vsyncpa [#allocation10], 1
    %2275 = vsyncpa [#allocation5], 1
    %s2276 = scalar_lea.sflag [#allocation5], 1
    %2277 = vsyncpa %s2276, 1

</llo_original>
